<compile_context>
chip_gen: v7x
topology: tpu7x:2x2x1
jax: 0.10.0
libtpu: 0.0.40
codegen_flags: <defaults>
</compile_context>

<pallas_src>
import functools
import math

import jax
import jax.numpy as jnp
from jax.experimental import pallas as pl
from jax.experimental.pallas import tpu as pltpu

# ---- module constants (from progan.py) --------------------------------------
ALPHA = 0.0
NC = 2
NDF = 64
NUM_BLOCKS = 1
TOTAL_BLOCKS = 5

VMEM_LIMIT_BYTES = 32 * 1024 * 1024   # explicit scoped-VMEM cap (safe on v5e/v6e/v7x)


# ---- helpers -----------------------------------------------------------------
def _round_up(x, m):
    return (x + m - 1) // m * m


def _largest_tile(total, cap, mult):
    """Largest multiple of `mult` that is <= cap and divides `total` exactly."""
    cap = max(mult, min(cap, total))
    for t in range(cap - cap % mult, 0, -mult):
        if total % t == 0:
            return t
    return mult


def _pad2d(x, rows, cols):
    pr, pc = rows - x.shape[0], cols - x.shape[1]
    if pr == 0 and pc == 0:
        return x
    return jnp.pad(x, ((0, pr), (0, pc)))


# ---- Pallas kernel 1: matmul + bias (+ optional add) + activation (MXU) ------
def matmul_act_kernel(*refs, act, has_add):
    if has_add:
        a_ref, b_ref, bias_ref, add_ref, o_ref, acc_ref = refs
    else:
        a_ref, b_ref, bias_ref, o_ref, acc_ref = refs

    k = pl.program_id(1)

    @pl.when(k == 0)
    def _():
        acc_ref[...] = jnp.zeros_like(acc_ref)

    # bf16 operands, f32 accumulation on the MXU.
    acc_ref[...] += jnp.dot(a_ref[...], b_ref[...],
                            preferred_element_type=jnp.float32)

    @pl.when(k == pl.num_programs(1) - 1)
    def _():
        y = acc_ref[...] + bias_ref[...]
        if has_add:
            y = y + add_ref[...]
        if act == "leaky_relu":
            y = jnp.where(y > 0, y, 0.2 * y)
        elif act == "sigmoid":
            y = jax.nn.sigmoid(y)
        o_ref[...] = y.astype(o_ref.dtype)


def matmul_act(a, b, bias=None, add=None, act="none", tk_max=2048, tn_max=512):
    """out = act(a @ b + bias [+ add]), bf16 operands / f32 accumulation."""
    M, K = a.shape
    K2, N = b.shape
    assert K == K2
    Mp = _round_up(M, 16)
    Kp = _round_up(K, 128)
    Np = _round_up(N, 128)

    tk = _largest_tile(Kp, tk_max, 128)          # clamps tiny K (e.g. K=2 -> 128)
    tn = _largest_tile(Np, tn_max, 128)
    if Np // tn == 1 and tn % 256 == 0:
        tn //= 2                                  # >=2 j tiles so v7x megacore splits

    a_p = _pad2d(a, Mp, Kp).astype(jnp.bfloat16)
    b_p = _pad2d(b, Kp, Np).astype(jnp.bfloat16)
    if bias is None:
        bias = jnp.zeros((N,), jnp.float32)
    bias_p = _pad2d(bias.reshape(1, N).astype(jnp.float32), 1, Np)

    has_add = add is not None
    operands = [a_p, b_p, bias_p]
    in_specs = [
        pl.BlockSpec((Mp, tk), lambda j, k: (0, k)),   # activations (bf16)
        pl.BlockSpec((tk, tn), lambda j, k: (k, j)),   # weights (bf16)
        pl.BlockSpec((1, tn), lambda j, k: (0, j)),    # bias (f32, tiny)
    ]
    if has_add:
        add_p = _pad2d(add.astype(jnp.float32), Mp, Np)
        operands.append(add_p)
        in_specs.append(pl.BlockSpec((Mp, tn), lambda j, k: (0, j)))

    grid = (Np // tn, Kp // tk)
    out = pl.pallas_call(
        functools.partial(matmul_act_kernel, act=act, has_add=has_add),
        out_shape=jax.ShapeDtypeStruct((Mp, Np), jnp.float32),
        grid_spec=pltpu.PrefetchScalarGridSpec(
            num_scalar_prefetch=0,
            grid=grid,
            in_specs=in_specs,
            out_specs=pl.BlockSpec((Mp, tn), lambda j, k: (0, j)),
            scratch_shapes=[pltpu.VMEM((Mp, tn), jnp.float32)],
        ),
        compiler_params=pltpu.CompilerParams(
            dimension_semantics=("parallel", "arbitrary"),
            vmem_limit_bytes=VMEM_LIMIT_BYTES),
    )(*operands)
    return out[:M, :N]


# ---- Pallas kernel 2: mat-vec (N == 1) as VPU/XLU K-reduction + activation ---
def matvec_act_kernel(a_ref, w_ref, o_ref, acc_ref, *, act):
    k = pl.program_id(0)

    @pl.when(k == 0)
    def _():
        acc_ref[...] = jnp.zeros_like(acc_ref)

    prod = a_ref[...].astype(jnp.float32) * w_ref[...].astype(jnp.float32)
    acc_ref[...] += jnp.sum(prod, axis=1, keepdims=True)

    @pl.when(k == pl.num_programs(0) - 1)
    def _():
        y = acc_ref[...]
        if act == "leaky_relu":
            y = jnp.where(y > 0, y, 0.2 * y)
        elif act == "sigmoid":
            y = jax.nn.sigmoid(y)
        o_ref[...] = y.astype(o_ref.dtype)


def matvec_act(a, w_vec, act="none", tk_max=8192):
    """out[m] = act(sum_k a[m,k] * w_vec[k]) — no 128-lane weight padding, no MXU."""
    M, K = a.shape
    assert w_vec.shape == (K,)
    Mp = _round_up(M, 8)
    Kp = _round_up(K, 128)
    tk = _largest_tile(Kp, tk_max, 128)

    a_p = _pad2d(a, Mp, Kp).astype(jnp.bfloat16)
    w_p = _pad2d(w_vec.reshape(1, K), 1, Kp).astype(jnp.bfloat16)

    out = pl.pallas_call(
        functools.partial(matvec_act_kernel, act=act),
        out_shape=jax.ShapeDtypeStruct((Mp, 1), jnp.float32),
        grid_spec=pltpu.PrefetchScalarGridSpec(
            num_scalar_prefetch=0,
            grid=(Kp // tk,),
            in_specs=[
                pl.BlockSpec((Mp, tk), lambda k: (0, k)),
                pl.BlockSpec((1, tk), lambda k: (0, k)),
            ],
            out_specs=pl.BlockSpec((Mp, 1), lambda k: (0, 0)),
            scratch_shapes=[pltpu.VMEM((Mp, 1), jnp.float32)],
        ),
        compiler_params=pltpu.CompilerParams(
            dimension_semantics=("arbitrary",),
            vmem_limit_bytes=VMEM_LIMIT_BYTES),
    )(a_p, w_p)
    return out[:M, 0]


# ---- glue: im2col + conv wrapper (all FLOPs run inside the kernels) ----------
def im2col_3d(x, ksize, pad):
    """x: (N, C, D, H, W) -> (N*Do*Ho*Wo, C*k^3), patch order (C, kd, kh, kw)."""
    n, c, d, h, w = x.shape
    if pad > 0:
        x = jnp.pad(x, ((0, 0), (0, 0), (pad, pad), (pad, pad), (pad, pad)))
    do = d + 2 * pad - ksize + 1
    ho = h + 2 * pad - ksize + 1
    wo = w + 2 * pad - ksize + 1
    cols = []
    for i in range(ksize):
        for j in range(ksize):
            for k in range(ksize):
                cols.append(x[:, :, i:i + do, j:j + ho, k:k + wo])
    patches = jnp.stack(cols, axis=0)                      # (k^3, N, C, Do, Ho, Wo)
    patches = patches.transpose(1, 3, 4, 5, 2, 0)          # (N, Do, Ho, Wo, C, k^3)
    return patches.reshape(n * do * ho * wo, c * ksize ** 3), (do, ho, wo)


def conv3d(x, w, bias=None, ksize=3, pad=0, add=None, act="none"):
    """PyTorch-style Conv3d (stride 1). w: (Cout, Cin, k, k, k). x: NCDHW."""
    n = x.shape[0]
    cout = w.shape[0]
    # cast to bf16 before im2col so the materialized patch matrix is half-size
    x = x.astype(jnp.bfloat16)
    w = w.astype(jnp.bfloat16)
    patches, (do, ho, wo) = im2col_3d(x, ksize, pad)
    wmat = w.reshape(cout, -1).T                           # (Cin*k^3, Cout)
    if cout < 128:
        # Too few output channels to fill MXU lanes: VPU K-reduction mat-vec.
        assert add is None and bias is None
        chans = [matvec_act(patches, wmat[:, c], act=act) for c in range(cout)]
        out = jnp.stack(chans, axis=-1)
    else:
        out = matmul_act(patches, wmat, bias=bias, add=add, act=act)
    return out.reshape(n, do, ho, wo, cout).transpose(0, 4, 1, 2, 3)


# ---- parameters (deterministic synthetic init, shapes from __init__) --------
def init_params(key):
    k1, k2, k3, k4 = jax.random.split(key, 4)

    def init(k, shape):
        fan_in = 1
        for s in shape[1:]:
            fan_in *= s
        return jax.random.normal(k, shape, jnp.float32) / math.sqrt(fan_in)

    return {
        "rgb8_w": init(k1, (NDF * 8, NC, 1, 1, 1)),            # rgb8 = Conv3d(nc, ndf*8, 1)
        "rgb8_b": jax.random.normal(k2, (NDF * 8,), jnp.float32) * 0.01,
        "b4_w1": init(k3, (NDF * 16, NDF * 8, 3, 3, 3)),       # block4 conv1, no bias
        "b4_w2": init(k4, (1, NDF * 16, 4, 4, 4)),             # block4 conv2, no bias
    }


# ---- forward (num_blocks = 1  =>  height = 0 branch) ------------------------
def blocked_discriminator_forward(params, x, d_loss, noise_key):
    # jnp.exp so a traced d_loss does not concretize under jit.
    loss_noise_prop = jnp.exp(jnp.asarray(-5.0, jnp.float32) *
                              jnp.asarray(d_loss, jnp.float32)) * 5.0
    n, _, d, h, w = x.shape

    # height == 0: y = rgb8(input); y += randn * loss_noise_prop (fused as `add`)
    # TODO(synk): torch.randn noise is inherently stochastic; replaced with a
    # deterministic jax.random.normal draw of identical distribution/scale.
    noise = jax.random.normal(noise_key, (n * d * h * w, NDF * 8),
                              jnp.float32) * loss_noise_prop
    y = conv3d(x, params["rgb8_w"], bias=params["rgb8_b"], ksize=1, pad=0,
               add=noise, act="none")

    # block4: Conv3d(ndf*8, ndf*16, 3, 1, 1) + LeakyReLU(0.2)
    h1 = conv3d(y, params["b4_w1"], ksize=3, pad=1, act="leaky_relu")
    # Conv3d(ndf*16, 1, 4, 1, 0), then sigmoid (from forward)
    out = conv3d(h1, params["b4_w2"], ksize=4, pad=0, act="sigmoid")
    return out


if __name__ == "__main__":
    key = jax.random.PRNGKey(0)
    pkey, xkey, nkey = jax.random.split(key, 3)
    params = init_params(pkey)

    # small input consistent with the module: NCDHW, nc=2, spatial 6^3
    x = jax.random.normal(xkey, (2, NC, 6, 6, 6), jnp.float32)
    d_loss = 0.7

    out = blocked_discriminator_forward(params, x, d_loss, nkey)
    out = jax.block_until_ready(out)
    assert out.shape == (2, 1, 3, 3, 3), out.shape
    assert bool(jnp.all(jnp.isfinite(out)))
    assert bool(jnp.all((out >= 0.0) & (out <= 1.0)))
    print("KERNEL_OK")
</pallas_src>

<mosaic_0001>
module attributes {stable_mosaic.version = 11 : i64} {
  func.func @matmul_act_kernel(%arg0: i32, %arg1: i32, %arg2: memref<432x128xbf16, #tpu.memory_space<vmem>>, %arg3: memref<128x256xbf16, #tpu.memory_space<vmem>>, %arg4: memref<1x256xf32, #tpu.memory_space<vmem>>, %arg5: memref<432x256xf32, #tpu.memory_space<vmem>>, %arg6: memref<432x256xf32, #tpu.memory_space<vmem>>, %arg7: memref<432x256xf32, #tpu.memory_space<vmem>>) attributes {dimension_semantics = [#tpu.dimension_semantics<parallel>, #tpu.dimension_semantics<arbitrary>], iteration_bounds = array<i64: 2, 1>, scalar_prefetch = 0 : i64, scratch_operands = 1 : i64, tpu.core_type = #tpu.core_type<tc>, window_params = [{transform_indices = @transform_0, window_bounds = array<i64: 432, 128>}, {transform_indices = @transform_1, window_bounds = array<i64: 128, 256>}, {transform_indices = @transform_2, window_bounds = array<i64: 1, 256>}, {transform_indices = @transform_3, window_bounds = array<i64: 432, 256>}, {transform_indices = @transform_4, window_bounds = array<i64: 432, 256>}]} {
    %c0_i32 = arith.constant 0 : i32
    %0 = arith.cmpi eq, %arg1, %c0_i32 : i32
    %1 = arith.extui %0 : i1 to i32
    %c0_i32_0 = arith.constant 0 : i32
    %2 = arith.cmpi ne, %1, %c0_i32_0 : i32
    scf.if %2 {
      %cst_10 = arith.constant 0.000000e+00 : f32
      %12 = vector.broadcast %cst_10 : f32 to vector<432x256xf32>
      %c0_11 = arith.constant 0 : index
      %c0_12 = arith.constant 0 : index
      %13 = vector.load %arg7[%c0_11, %c0_12] : memref<432x256xf32, #tpu.memory_space<vmem>>, vector<432x256xf32>
      tpu.vector_store %arg7[%c0_11, %c0_12], %12 {strides = array<i32>} : memref<432x256xf32, #tpu.memory_space<vmem>>, vector<432x256xf32>,
    } else {
    }
    %c0 = arith.constant 0 : index
    %c0_1 = arith.constant 0 : index
    %3 = vector.load %arg7[%c0, %c0_1] : memref<432x256xf32, #tpu.memory_space<vmem>>, vector<432x256xf32>
    %c0_2 = arith.constant 0 : index
    %c0_3 = arith.constant 0 : index
    %4 = vector.load %arg2[%c0_2, %c0_3] : memref<432x128xbf16, #tpu.memory_space<vmem>>, vector<432x128xbf16>
    %c0_4 = arith.constant 0 : index
    %c0_5 = arith.constant 0 : index
    %5 = vector.load %arg3[%c0_4, %c0_5] : memref<128x256xbf16, #tpu.memory_space<vmem>>, vector<128x256xbf16>
    %cst = arith.constant dense<0.000000e+00> : vector<432x256xf32>
    %6 = tpu.matmul %4, %5, %cst {dimension_numbers = #tpu.dot_dimension_numbers<[1], [0], [0], [1], [0, 0, 1, 1], [], []>} : vector<432x128xbf16>, vector<128x256xbf16>, vector<432x256xf32> -> vector<432x256xf32>
    %7 = arith.addf %3, %6 : vector<432x256xf32>
    %c0_6 = arith.constant 0 : index
    %c0_7 = arith.constant 0 : index
    %8 = vector.load %arg7[%c0_6, %c0_7] : memref<432x256xf32, #tpu.memory_space<vmem>>, vector<432x256xf32>
    tpu.vector_store %arg7[%c0_6, %c0_7], %7 {strides = array<i32>} : memref<432x256xf32, #tpu.memory_space<vmem>>, vector<432x256xf32>,
    %c0_i32_8 = arith.constant 0 : i32
    %9 = arith.cmpi eq, %arg1, %c0_i32_8 : i32
    %10 = arith.extui %9 : i1 to i32
    %c0_i32_9 = arith.constant 0 : i32
    %11 = arith.cmpi ne, %10, %c0_i32_9 : i32
    scf.if %11 {
      %c0_10 = arith.constant 0 : index
      %c0_11 = arith.constant 0 : index
      %12 = vector.load %arg7[%c0_10, %c0_11] : memref<432x256xf32, #tpu.memory_space<vmem>>, vector<432x256xf32>
      %c0_12 = arith.constant 0 : index
      %c0_13 = arith.constant 0 : index
      %13 = vector.load %arg4[%c0_12, %c0_13] : memref<1x256xf32, #tpu.memory_space<vmem>>, vector<1x256xf32>
      %14 = vector.broadcast %13 : vector<1x256xf32> to vector<432x256xf32>
      %15 = arith.addf %12, %14 : vector<432x256xf32>
      %c0_14 = arith.constant 0 : index
      %c0_15 = arith.constant 0 : index
      %16 = vector.load %arg5[%c0_14, %c0_15] : memref<432x256xf32, #tpu.memory_space<vmem>>, vector<432x256xf32>
      %17 = arith.addf %15, %16 : vector<432x256xf32>
      %c0_16 = arith.constant 0 : index
      %c0_17 = arith.constant 0 : index
      %18 = vector.load %arg6[%c0_16, %c0_17] : memref<432x256xf32, #tpu.memory_space<vmem>>, vector<432x256xf32>
      tpu.vector_store %arg6[%c0_16, %c0_17], %17 {strides = array<i32>} : memref<432x256xf32, #tpu.memory_space<vmem>>, vector<432x256xf32>,
    } else {
    }
    return
  }
  func.func @transform_0(%arg0: i32, %arg1: i32) -> (i32, i32) {
    %c0_i32 = arith.constant 0 : i32
    %c0_i32_0 = arith.constant 0 : i32
    return %c0_i32, %arg1 : i32, i32
  }
  func.func @transform_1(%arg0: i32, %arg1: i32) -> (i32, i32) {
    %c0_i32 = arith.constant 0 : i32
    return %arg1, %arg0 : i32, i32
  }
  func.func @transform_2(%arg0: i32, %arg1: i32) -> (i32, i32) {
    %c0_i32 = arith.constant 0 : i32
    %c0_i32_0 = arith.constant 0 : i32
    return %c0_i32, %arg0 : i32, i32
  }
  func.func @transform_3(%arg0: i32, %arg1: i32) -> (i32, i32) {
    %c0_i32 = arith.constant 0 : i32
    %c0_i32_0 = arith.constant 0 : i32
    return %c0_i32, %arg0 : i32, i32
  }
  func.func @transform_4(%arg0: i32, %arg1: i32) -> (i32, i32) {
    %c0_i32 = arith.constant 0 : i32
    %c0_i32_0 = arith.constant 0 : i32
    return %c0_i32, %arg0 : i32, i32
  }
}

</mosaic_0001>

<llo_original>
// kernel: tpu_custom_call.1
$region0: #{tpu_custom_call.1}
  #allocation0 [shape = 'u32[]', space=smem, size = 0x4, offset = 0x4, fixed_abs, tag = 'smem constant byte address 0x4 - core index']
  #allocation1 [shape = 'u32[144,128]{1,0:T(1,128)}', space=vmem, size = 0x12000, scoped, tag = 'internal scratch']
  #allocation2 [shape = 'f32[432,256]{1,0:T(8,128)}', space=vmem, size = 0x6c000, scoped, tag = 'scratch operand']
  %s0 = inlined_call_operand.hbm [shape: bf16[432,128], index: 0, kind: input, shape index: {}]
  %s1 = inlined_call_operand.hbm [shape: bf16[128,512], index: 1, kind: input, shape index: {}]
  %s2 = inlined_call_operand.vmem [shape: f32[1,512], index: 2, kind: input, shape index: {}]
  %s3 = inlined_call_operand.hbm [shape: f32[432,512], index: 3, kind: input, shape index: {}]
  %s4 = inlined_call_operand.hbm [shape: f32[432,512], index: 4, kind: output, shape index: {}]
  %s5 = sld [smem:[#allocation0]]
  $region69: #{tpu_custom_call.1} parent=0
    _
  %s7 = ssub.s32 1, %s5
  %s8 = scalar_select 0, %s7, %s5
  $region1: #{tpu_custom_call.1} parent=0
    #allocation3 [shape = 'u8[110592]{0}', space=vmem, size = 0x1b000, scoped, tag = 'input window, operand 0, single buffered']
    #allocation4 [shape = 's32[2]{0}', space=sflag, size = 0x8, scoped, tag = 'scoped memory for tpu_custom_call.1']
    #allocation5 [shape = 's32[2]{0}', space=sflag, size = 0x8, scoped, tag = 'scoped memory for tpu_custom_call.1']
    #allocation6 [shape = 'u8[131072]{0}', space=vmem, size = 0x20000, scoped, tag = 'input window, operand 1']
    #allocation7 [shape = 's32[2]{0}', space=sflag, size = 0x8, scoped, tag = 'scoped memory for tpu_custom_call.1']
    #allocation8 [shape = 'u8[884736]{0}', space=vmem, size = 0xd8000, scoped, tag = 'input window, operand 3']
    #allocation9 [shape = 'u8[884736]{0}', space=vmem, size = 0xd8000, scoped, tag = 'output window, operand 0']
    %9 = vsyncpa [#allocation4], 0
    %10 = vsyncpa [#allocation7], 0
    %s11 = scalar_lea.sflag [#allocation7], 1
    %12 = vsyncpa %s11, 0
    %13 = vsyncpa [#allocation5], 0
    %s14 = scalar_lea.sflag [#allocation5], 1
    %15 = vsyncpa %s14, 0
    loop: start=0, step=1, limit=4
    $region2: #{tpu_custom_call.1} parent=1 // loop_pre_header
      _
    $region3: #{tpu_custom_call.1} parent=1 // loop_header
      %s17 = sphi 0, %s21
      %p18 = scmp.ge.s32.totalorder %s17, 4
      %s24 = sphi 0, %s36
      %s25 = sphi 0, %s32
      %s26 = sphi 0, %s24
      %s27 = sphi 0, %s25
      %s28 = sphi 0, %s26
      %s29 = sphi 0, %s27
      %s39 = sphi 0, %s41
      %s42 = sphi 0, %s39
      %s43 = sphi 0, %s42
      %s59 = sphi 0, %s43
      %s67 = sphi 0, %s69
      %s70 = sphi 0, %s67
      %s71 = sphi 0, %s70
      %s87 = sphi 0, %s71
      %s93 = sphi 0, %s95
      %s96 = sphi 0, %s93
      %s97 = sphi 0, %s96
      %s113 = sphi 0, %s97
      %s119 = sphi 0, %s121
      %s122 = sphi 0, %s119
      %s123 = sphi 0, %s122
      %s139 = sphi 0, %s123
      %s145 = sphi 0, %s147
      %s148 = sphi 0, %s145
      %s149 = sphi 0, %s148
      %s165 = sphi 0, %s149
    $region4: #{tpu_custom_call.1} parent=1 // loop_header_branch
      %20 = sbr.rel (%p18) target = $region8
    $region5: #{tpu_custom_call.1} parent=1 // loop_body
      %s22 = ssub.s32 %s17, 1
      %s23 = ssub.s32 %s17, 2
      %s30 = sadd.s32 1, %s25
      %p31 = scmp.ge.s32.totalorder %s30, 1
      %s32 = scalar_select %p31, 0, %s30
      %s33 = sadd.s32 1, %s24
      %s34 = scalar_select %p31, %s33, %s24
      %p35 = scmp.ge.s32.totalorder %s34, 2
      %s36 = scalar_select %p35, 0, %s34
      %s37 = ssub.s32 %s25, %s32
      %p38 = scmp.eq.s32.totalorder %s37, 0
      %s40 = sadd.s32 %s39, 1
      %s41 = scalar_select %p38, %s39, %s40
      %p44 = pneg %p38
      %p45 = scmp.eq.s32.totalorder %s17, 1
      %p46 = por %p44, %p45
      %p47 = scmp.ne.s32.totalorder %s39, %s42
      %p48 = scmp.eq.s32.totalorder %s17, 0
      %p49 = por %p47, %p48
      %p50 = scmp.ne.s32.totalorder %s39, %s42
      %p51 = scmp.eq.s32.totalorder %s22, 1
      %p52 = por %p50, %p51
      %p53 = scmp.ne.s32.totalorder %s42, %s43
      %p54 = scmp.eq.s32.totalorder %s22, 0
      %p55 = por %p53, %p54
      %p56 = scmp.ne.s32.totalorder %s42, %s43
      %p57 = scmp.eq.s32.totalorder %s23, 1
      %p58 = por %p56, %p57
      %p60 = scmp.ne.s32.totalorder %s43, %s59
      %p61 = scmp.eq.s32.totalorder %s23, 0
      %p62 = por %p60, %p61
      %s63 = ssub.s32 %s25, %s32
      %s64 = ssub.s32 %s24, %s36
      %s65 = sor.u32 %s63, %s64
      %p66 = scmp.eq.s32.totalorder %s65, 0
      %s68 = sadd.s32 %s67, 1
      %s69 = scalar_select %p66, %s67, %s68
      %p72 = pneg %p66
      %p73 = scmp.eq.s32.totalorder %s17, 1
      %p74 = por %p72, %p73
      %p75 = scmp.ne.s32.totalorder %s67, %s70
      %p76 = scmp.eq.s32.totalorder %s17, 0
      %p77 = por %p75, %p76
      %p78 = scmp.ne.s32.totalorder %s67, %s70
      %p79 = scmp.eq.s32.totalorder %s22, 1
      %p80 = por %p78, %p79
      %p81 = scmp.ne.s32.totalorder %s70, %s71
      %p82 = scmp.eq.s32.totalorder %s22, 0
      %p83 = por %p81, %p82
      %p84 = scmp.ne.s32.totalorder %s70, %s71
      %p85 = scmp.eq.s32.totalorder %s23, 1
      %p86 = por %p84, %p85
      %p88 = scmp.ne.s32.totalorder %s71, %s87
      %p89 = scmp.eq.s32.totalorder %s23, 0
      %p90 = por %p88, %p89
      %s91 = ssub.s32 %s24, %s36
      %p92 = scmp.eq.s32.totalorder %s91, 0
      %s94 = sadd.s32 %s93, 1
      %s95 = scalar_select %p92, %s93, %s94
      %p98 = pneg %p92
      %p99 = scmp.eq.s32.totalorder %s17, 1
      %p100 = por %p98, %p99
      %p101 = scmp.ne.s32.totalorder %s93, %s96
      %p102 = scmp.eq.s32.totalorder %s17, 0
      %p103 = por %p101, %p102
      %p104 = scmp.ne.s32.totalorder %s93, %s96
      %p105 = scmp.eq.s32.totalorder %s22, 1
      %p106 = por %p104, %p105
      %p107 = scmp.ne.s32.totalorder %s96, %s97
      %p108 = scmp.eq.s32.totalorder %s22, 0
      %p109 = por %p107, %p108
      %p110 = scmp.ne.s32.totalorder %s96, %s97
      %p111 = scmp.eq.s32.totalorder %s23, 1
      %p112 = por %p110, %p111
      %p114 = scmp.ne.s32.totalorder %s97, %s113
      %p115 = scmp.eq.s32.totalorder %s23, 0
      %p116 = por %p114, %p115
      %s117 = ssub.s32 %s24, %s36
      %p118 = scmp.eq.s32.totalorder %s117, 0
      %s120 = sadd.s32 %s119, 1
      %s121 = scalar_select %p118, %s119, %s120
      %p124 = pneg %p118
      %p125 = scmp.eq.s32.totalorder %s17, 1
      %p126 = por %p124, %p125
      %p127 = scmp.ne.s32.totalorder %s119, %s122
      %p128 = scmp.eq.s32.totalorder %s17, 0
      %p129 = por %p127, %p128
      %p130 = scmp.ne.s32.totalorder %s119, %s122
      %p131 = scmp.eq.s32.totalorder %s22, 1
      %p132 = por %p130, %p131
      %p133 = scmp.ne.s32.totalorder %s122, %s123
      %p134 = scmp.eq.s32.totalorder %s22, 0
      %p135 = por %p133, %p134
      %p136 = scmp.ne.s32.totalorder %s122, %s123
      %p137 = scmp.eq.s32.totalorder %s23, 1
      %p138 = por %p136, %p137
      %p140 = scmp.ne.s32.totalorder %s123, %s139
      %p141 = scmp.eq.s32.totalorder %s23, 0
      %p142 = por %p140, %p141
      %s143 = ssub.s32 %s24, %s36
      %p144 = scmp.eq.s32.totalorder %s143, 0
      %s146 = sadd.s32 %s145, 1
      %s147 = scalar_select %p144, %s145, %s146
      %p150 = pneg %p144
      %p151 = scmp.eq.s32.totalorder %s17, 1
      %p152 = por %p150, %p151
      %p153 = scmp.ne.s32.totalorder %s145, %s148
      %p154 = scmp.eq.s32.totalorder %s17, 0
      %p155 = por %p153, %p154
      %p156 = scmp.ne.s32.totalorder %s145, %s148
      %p157 = scmp.eq.s32.totalorder %s22, 1
      %p158 = por %p156, %p157
      %p159 = scmp.ne.s32.totalorder %s148, %s149
      %p160 = scmp.eq.s32.totalorder %s22, 0
      %p161 = por %p159, %p160
      %p162 = scmp.ne.s32.totalorder %s148, %s149
      %p163 = scmp.eq.s32.totalorder %s23, 1
      %p164 = por %p162, %p163
      %p166 = scmp.ne.s32.totalorder %s149, %s165
      %p167 = scmp.eq.s32.totalorder %s23, 0
      %p168 = por %p166, %p167
      %p169 = scmp.le.s32.totalorder 1, %s17
      %p170 = scmp.lt.s32.totalorder %s17, 3
      %p171 = pnand %p169, %p170
      %p172 = pneg %p171
      // Predicated region
      $region9: #{tpu_custom_call.1} parent=5 // pred_check
        _
      $region10: #{tpu_custom_call.1} parent=5 // pred_check_branch
        %174 = sbr.rel (%p171) target = $region12
      $region11: #{tpu_custom_call.1} parent=5 // pred_region
        %s175 = ssub.s32 %s17, 1
        // Predicated region
        $region13: #{tpu_custom_call.1} parent=11 // pred_check
          %p176 = pneg %p55
        $region14: #{tpu_custom_call.1} parent=11 // pred_check_branch
          %178 = sbr.rel (%p176) target = $region16
        $region15: #{tpu_custom_call.1} parent=11 // pred_region
          %s180 = ssub.s32 3456, 3456
          %181 = vsyncadd [#allocation4], %s180
          %s182 = smul.addr %s27, 64
          %s183 = scalar_lea.hbm %s0, %s182
          %s184 = sshll.u32 [#allocation3], 4
          %s185 = int_to_ptr.vmem [resolvable:$true] %s184
          %190 = dma.hbm_to_vmem [thread:$0]  %s183, 3456, %s185, [#allocation4], 64, 64, 4
        $region16: #{tpu_custom_call.1} parent=11 // pred_fallthru
          _
      $region12: #{tpu_custom_call.1} parent=5 // pred_fallthru
        _
      %p191 = scmp.lt.s32.totalorder %s17, 2
      // Predicated region
      $region17: #{tpu_custom_call.1} parent=5 // pred_check
        %p192 = pneg %p191
      $region18: #{tpu_custom_call.1} parent=5 // pred_check_branch
        %194 = sbr.rel (%p192) target = $region20
      $region19: #{tpu_custom_call.1} parent=5 // pred_region
        // Predicated region
        $region21: #{tpu_custom_call.1} parent=19 // pred_check
          %p195 = pneg %p77
        $region22: #{tpu_custom_call.1} parent=19 // pred_check_branch
          %197 = sbr.rel (%p195) target = $region24
        $region23: #{tpu_custom_call.1} parent=19 // pred_region
          %s198 = sand.u32 %s17, 1
          %s199 = scalar_lea.sflag [#allocation7], %s198
          %s200 = sand.u32 %s67, 1
          %s201 = smul.addr %s200, 128
          %s202 = scalar_lea.vmem [#allocation6], %s201
          %s203 = smul.u32 16, %s25
          %s204 = smul.u32 2, %s24
          %s206 = ssub.s32 2048, 2048
          %207 = vsyncadd %s199, %s206
          %s208 = smul.addr %s203, 4
          %s209 = sadd.s32 %s204, %s208
          %s210 = smul.addr %s209, 64
          %s211 = scalar_lea.hbm %s1, %s210
          %s212 = sshll.u32 %s202, 4
          %s213 = int_to_ptr.vmem [resolvable:$true] %s212
          %218 = dma.hbm_to_vmem [thread:$0]  %s211, 2048, %s213, %s199, 256, 128, 8
        $region24: #{tpu_custom_call.1} parent=19 // pred_fallthru
          _
        // Predicated region
        $region25: #{tpu_custom_call.1} parent=19 // pred_check
          %p219 = pneg %p103
        $region26: #{tpu_custom_call.1} parent=19 // pred_check_branch
          %221 = sbr.rel (%p219) target = $region28
        $region27: #{tpu_custom_call.1} parent=19 // pred_region
          %s222 = smul.u32 2, %s24
          %p223 = scmp.lt.s32.totalorder %s222, 3
          %s224 = scalar_select %p223, %s222, 3
          %s225 = scalar_lea.vmem %s2, %s224
          %s226 = smul.u32 2, %s24
        $region28: #{tpu_custom_call.1} parent=19 // pred_fallthru
          _
        // Predicated region
        $region29: #{tpu_custom_call.1} parent=19 // pred_check
          %p227 = pneg %p129
        $region30: #{tpu_custom_call.1} parent=19 // pred_check_branch
          %229 = sbr.rel (%p227) target = $region32
        $region31: #{tpu_custom_call.1} parent=19 // pred_region
          %s230 = sand.u32 %s17, 1
          %s231 = scalar_lea.sflag [#allocation7], %s230
          %s232 = sand.u32 %s119, 1
          %s233 = smul.addr %s232, 864
          %s234 = scalar_lea.vmem [#allocation8], %s233
          %s235 = smul.u32 2, %s24
          %s237 = ssub.s32 13824, 13824
          %238 = vsyncadd %s231, %s237
          %s239 = smul.addr %s235, 128
          %s240 = scalar_lea.hbm %s3, %s239
          %s241 = sshll.u32 %s234, 4
          %s242 = int_to_ptr.vmem [resolvable:$true] %s241
          %247 = dma.hbm_to_vmem [thread:$0]  %s240, 13824, %s242, %s231, 512, 256, 16
        $region32: #{tpu_custom_call.1} parent=19 // pred_fallthru
          _
      $region20: #{tpu_custom_call.1} parent=5 // pred_fallthru
        _
      %p248 = scmp.le.s32.totalorder 1, %s17
      %p249 = scmp.lt.s32.totalorder %s17, 3
      %p250 = pnand %p248, %p249
      %p251 = pneg %p250
      // Predicated region
      $region33: #{tpu_custom_call.1} parent=5 // pred_check
        _
      $region34: #{tpu_custom_call.1} parent=5 // pred_check_branch
        %253 = sbr.rel (%p250) target = $region36
      $region35: #{tpu_custom_call.1} parent=5 // pred_region
        %s254 = ssub.s32 %s17, 1
        // Predicated region
        $region37: #{tpu_custom_call.1} parent=35 // pred_check
          %p255 = pneg %p55
        $region38: #{tpu_custom_call.1} parent=35 // pred_check_branch
          %257 = sbr.rel (%p255) target = $region40
        $region39: #{tpu_custom_call.1} parent=35 // pred_region
          %258 = dma.done [#allocation4], 3456
        $region40: #{tpu_custom_call.1} parent=35 // pred_fallthru
          _
        %s259 = sand.u32 %s22, 1
        %s260 = scalar_lea.sflag [#allocation7], %s259
        %s261 = sand.u32 %s70, 1
        %s262 = smul.addr %s261, 128
        %s263 = scalar_lea.vmem [#allocation6], %s262
        // Predicated region
        $region41: #{tpu_custom_call.1} parent=35 // pred_check
          %p264 = pneg %p83
        $region42: #{tpu_custom_call.1} parent=35 // pred_check_branch
          %266 = sbr.rel (%p264) target = $region44
        $region43: #{tpu_custom_call.1} parent=35 // pred_region
          %267 = dma.done %s260, 2048
        $region44: #{tpu_custom_call.1} parent=35 // pred_fallthru
          _
        %s268 = sand.u32 %s22, 1
        %s269 = scalar_lea.sflag [#allocation7], %s268
        %s270 = sand.u32 %s122, 1
        %s271 = smul.addr %s270, 864
        %s272 = scalar_lea.vmem [#allocation8], %s271
        // Predicated region
        $region45: #{tpu_custom_call.1} parent=35 // pred_check
          %p273 = pneg %p135
        $region46: #{tpu_custom_call.1} parent=35 // pred_check_branch
          %275 = sbr.rel (%p273) target = $region48
        $region47: #{tpu_custom_call.1} parent=35 // pred_region
          %276 = dma.done %s269, 13824
        $region48: #{tpu_custom_call.1} parent=35 // pred_fallthru
          _
        %p277 = pneg %p55
        %p278 = pneg %p52
        %s279 = sand.u32 %s22, 1
        %s280 = scalar_lea.sflag [#allocation7], %s279
        %s281 = sand.u32 %s70, 1
        %s282 = smul.addr %s281, 128
        %s283 = scalar_lea.vmem [#allocation6], %s282
        %p284 = pneg %p83
        %p285 = pneg %p80
        %s286 = smul.u32 2, %s26
        %p287 = scmp.lt.s32.totalorder %s286, 3
        %s288 = scalar_select %p287, %s286, 3
        %s289 = scalar_lea.vmem %s2, %s288
        %p290 = pneg %p109
        %p291 = pneg %p106
        %s292 = sand.u32 %s22, 1
        %s293 = scalar_lea.sflag [#allocation7], %s292
        %s294 = sand.u32 %s122, 1
        %s295 = smul.addr %s294, 864
        %s296 = scalar_lea.vmem [#allocation8], %s295
        %p297 = pneg %p135
        %p298 = pneg %p132
        %p299 = pneg %p161
        %p300 = pneg %p158
        %s301 = sand.u32 %s148, 1
        %s302 = scalar_lea.sflag [#allocation5], %s301
        %s303 = sand.u32 %s148, 1
        %s304 = smul.addr %s303, 864
        %s305 = scalar_lea.vmem [#allocation9], %s304
        %s306 = smul.u32 16, %s27
        %s307 = smul.u32 2, %s26
        %s308 = smul.u32 2, %s26
        %p309 = scmp.lt.s32.totalorder %s308, 3
        %s310 = scalar_select %p309, %s308, 3
        %s311 = scalar_lea.vmem %s2, %s310
        %s312 = smul.u32 2, %s26
        %s313 = smul.u32 2, %s26
        %s314 = smul.u32 2, %s26
        %p316 = scmp.eq.s32.totalorder %s27, 0
        // Predicated region
        $region49: #{tpu_custom_call.1} parent=35 // pred_check
          %p317 = pneg %p316
        $region50: #{tpu_custom_call.1} parent=35 // pred_check_branch
          %319 = sbr.rel (%p317) target = $region52
        $region51: #{tpu_custom_call.1} parent=35 // pred_region
          %320 = vst [vmem:[#allocation2] sm:$0xff] 0.0
          %321 = vst [vmem:[#allocation2 + $0x8] sm:$0xff] 0.0
          %322 = vst [vmem:[#allocation2 + $0x10] sm:$0xff] 0.0
          %323 = vst [vmem:[#allocation2 + $0x18] sm:$0xff] 0.0
          %324 = vst [vmem:[#allocation2 + $0x20] sm:$0xff] 0.0
          %325 = vst [vmem:[#allocation2 + $0x28] sm:$0xff] 0.0
          %326 = vst [vmem:[#allocation2 + $0x30] sm:$0xff] 0.0
          %327 = vst [vmem:[#allocation2 + $0x38] sm:$0xff] 0.0
          %328 = vst [vmem:[#allocation2 + $0x40] sm:$0xff] 0.0
          %329 = vst [vmem:[#allocation2 + $0x48] sm:$0xff] 0.0
          %330 = vst [vmem:[#allocation2 + $0x50] sm:$0xff] 0.0
          %331 = vst [vmem:[#allocation2 + $0x58] sm:$0xff] 0.0
          %332 = vst [vmem:[#allocation2 + $0x60] sm:$0xff] 0.0
          %333 = vst [vmem:[#allocation2 + $0x68] sm:$0xff] 0.0
          %334 = vst [vmem:[#allocation2 + $0x70] sm:$0xff] 0.0
          %335 = vst [vmem:[#allocation2 + $0x78] sm:$0xff] 0.0
          %336 = vst [vmem:[#allocation2 + $0x80] sm:$0xff] 0.0
          %337 = vst [vmem:[#allocation2 + $0x88] sm:$0xff] 0.0
          %338 = vst [vmem:[#allocation2 + $0x90] sm:$0xff] 0.0
          %339 = vst [vmem:[#allocation2 + $0x98] sm:$0xff] 0.0
          %340 = vst [vmem:[#allocation2 + $0xa0] sm:$0xff] 0.0
          %341 = vst [vmem:[#allocation2 + $0xa8] sm:$0xff] 0.0
          %342 = vst [vmem:[#allocation2 + $0xb0] sm:$0xff] 0.0
          %343 = vst [vmem:[#allocation2 + $0xb8] sm:$0xff] 0.0
          %344 = vst [vmem:[#allocation2 + $0xc0] sm:$0xff] 0.0
          %345 = vst [vmem:[#allocation2 + $0xc8] sm:$0xff] 0.0
          %346 = vst [vmem:[#allocation2 + $0xd0] sm:$0xff] 0.0
          %347 = vst [vmem:[#allocation2 + $0xd8] sm:$0xff] 0.0
          %348 = vst [vmem:[#allocation2 + $0xe0] sm:$0xff] 0.0
          %349 = vst [vmem:[#allocation2 + $0xe8] sm:$0xff] 0.0
          %350 = vst [vmem:[#allocation2 + $0xf0] sm:$0xff] 0.0
          %351 = vst [vmem:[#allocation2 + $0xf8] sm:$0xff] 0.0
          %352 = vst [vmem:[#allocation2 + $0x100] sm:$0xff] 0.0
          %353 = vst [vmem:[#allocation2 + $0x108] sm:$0xff] 0.0
          %354 = vst [vmem:[#allocation2 + $0x110] sm:$0xff] 0.0
          %355 = vst [vmem:[#allocation2 + $0x118] sm:$0xff] 0.0
          %356 = vst [vmem:[#allocation2 + $0x120] sm:$0xff] 0.0
          %357 = vst [vmem:[#allocation2 + $0x128] sm:$0xff] 0.0
          %358 = vst [vmem:[#allocation2 + $0x130] sm:$0xff] 0.0
          %359 = vst [vmem:[#allocation2 + $0x138] sm:$0xff] 0.0
          %360 = vst [vmem:[#allocation2 + $0x140] sm:$0xff] 0.0
          %361 = vst [vmem:[#allocation2 + $0x148] sm:$0xff] 0.0
          %362 = vst [vmem:[#allocation2 + $0x150] sm:$0xff] 0.0
          %363 = vst [vmem:[#allocation2 + $0x158] sm:$0xff] 0.0
          %364 = vst [vmem:[#allocation2 + $0x160] sm:$0xff] 0.0
          %365 = vst [vmem:[#allocation2 + $0x168] sm:$0xff] 0.0
          %366 = vst [vmem:[#allocation2 + $0x170] sm:$0xff] 0.0
          %367 = vst [vmem:[#allocation2 + $0x178] sm:$0xff] 0.0
          %368 = vst [vmem:[#allocation2 + $0x180] sm:$0xff] 0.0
          %369 = vst [vmem:[#allocation2 + $0x188] sm:$0xff] 0.0
          %370 = vst [vmem:[#allocation2 + $0x190] sm:$0xff] 0.0
          %371 = vst [vmem:[#allocation2 + $0x198] sm:$0xff] 0.0
          %372 = vst [vmem:[#allocation2 + $0x1a0] sm:$0xff] 0.0
          %373 = vst [vmem:[#allocation2 + $0x1a8] sm:$0xff] 0.0
          %374 = vst [vmem:[#allocation2 + $0x1b0] sm:$0xff] 0.0
          %375 = vst [vmem:[#allocation2 + $0x1b8] sm:$0xff] 0.0
          %376 = vst [vmem:[#allocation2 + $0x1c0] sm:$0xff] 0.0
          %377 = vst [vmem:[#allocation2 + $0x1c8] sm:$0xff] 0.0
          %378 = vst [vmem:[#allocation2 + $0x1d0] sm:$0xff] 0.0
          %379 = vst [vmem:[#allocation2 + $0x1d8] sm:$0xff] 0.0
          %380 = vst [vmem:[#allocation2 + $0x1e0] sm:$0xff] 0.0
          %381 = vst [vmem:[#allocation2 + $0x1e8] sm:$0xff] 0.0
          %382 = vst [vmem:[#allocation2 + $0x1f0] sm:$0xff] 0.0
          %383 = vst [vmem:[#allocation2 + $0x1f8] sm:$0xff] 0.0
          %384 = vst [vmem:[#allocation2 + $0x200] sm:$0xff] 0.0
          %385 = vst [vmem:[#allocation2 + $0x208] sm:$0xff] 0.0
          %386 = vst [vmem:[#allocation2 + $0x210] sm:$0xff] 0.0
          %387 = vst [vmem:[#allocation2 + $0x218] sm:$0xff] 0.0
          %388 = vst [vmem:[#allocation2 + $0x220] sm:$0xff] 0.0
          %389 = vst [vmem:[#allocation2 + $0x228] sm:$0xff] 0.0
          %390 = vst [vmem:[#allocation2 + $0x230] sm:$0xff] 0.0
          %391 = vst [vmem:[#allocation2 + $0x238] sm:$0xff] 0.0
          %392 = vst [vmem:[#allocation2 + $0x240] sm:$0xff] 0.0
          %393 = vst [vmem:[#allocation2 + $0x248] sm:$0xff] 0.0
          %394 = vst [vmem:[#allocation2 + $0x250] sm:$0xff] 0.0
          %395 = vst [vmem:[#allocation2 + $0x258] sm:$0xff] 0.0
          %396 = vst [vmem:[#allocation2 + $0x260] sm:$0xff] 0.0
          %397 = vst [vmem:[#allocation2 + $0x268] sm:$0xff] 0.0
          %398 = vst [vmem:[#allocation2 + $0x270] sm:$0xff] 0.0
          %399 = vst [vmem:[#allocation2 + $0x278] sm:$0xff] 0.0
          %400 = vst [vmem:[#allocation2 + $0x280] sm:$0xff] 0.0
          %401 = vst [vmem:[#allocation2 + $0x288] sm:$0xff] 0.0
          %402 = vst [vmem:[#allocation2 + $0x290] sm:$0xff] 0.0
          %403 = vst [vmem:[#allocation2 + $0x298] sm:$0xff] 0.0
          %404 = vst [vmem:[#allocation2 + $0x2a0] sm:$0xff] 0.0
          %405 = vst [vmem:[#allocation2 + $0x2a8] sm:$0xff] 0.0
          %406 = vst [vmem:[#allocation2 + $0x2b0] sm:$0xff] 0.0
          %407 = vst [vmem:[#allocation2 + $0x2b8] sm:$0xff] 0.0
          %408 = vst [vmem:[#allocation2 + $0x2c0] sm:$0xff] 0.0
          %409 = vst [vmem:[#allocation2 + $0x2c8] sm:$0xff] 0.0
          %410 = vst [vmem:[#allocation2 + $0x2d0] sm:$0xff] 0.0
          %411 = vst [vmem:[#allocation2 + $0x2d8] sm:$0xff] 0.0
          %412 = vst [vmem:[#allocation2 + $0x2e0] sm:$0xff] 0.0
          %413 = vst [vmem:[#allocation2 + $0x2e8] sm:$0xff] 0.0
          %414 = vst [vmem:[#allocation2 + $0x2f0] sm:$0xff] 0.0
          %415 = vst [vmem:[#allocation2 + $0x2f8] sm:$0xff] 0.0
          %416 = vst [vmem:[#allocation2 + $0x300] sm:$0xff] 0.0
          %417 = vst [vmem:[#allocation2 + $0x308] sm:$0xff] 0.0
          %418 = vst [vmem:[#allocation2 + $0x310] sm:$0xff] 0.0
          %419 = vst [vmem:[#allocation2 + $0x318] sm:$0xff] 0.0
          %420 = vst [vmem:[#allocation2 + $0x320] sm:$0xff] 0.0
          %421 = vst [vmem:[#allocation2 + $0x328] sm:$0xff] 0.0
          %422 = vst [vmem:[#allocation2 + $0x330] sm:$0xff] 0.0
          %423 = vst [vmem:[#allocation2 + $0x338] sm:$0xff] 0.0
          %424 = vst [vmem:[#allocation2 + $0x340] sm:$0xff] 0.0
          %425 = vst [vmem:[#allocation2 + $0x348] sm:$0xff] 0.0
          %426 = vst [vmem:[#allocation2 + $0x350] sm:$0xff] 0.0
          %427 = vst [vmem:[#allocation2 + $0x358] sm:$0xff] 0.0
        $region52: #{tpu_custom_call.1} parent=35 // pred_fallthru
          _
        %v428 = vld [vmem:[#allocation2] sm:$0xff]
        %v429 = vld [vmem:[#allocation2 + $0x8] sm:$0xff]
        %v430 = vld [vmem:[#allocation2 + $0x10] sm:$0xff]
        %v431 = vld [vmem:[#allocation2 + $0x18] sm:$0xff]
        %v432 = vld [vmem:[#allocation2 + $0x20] sm:$0xff]
        %v433 = vld [vmem:[#allocation2 + $0x28] sm:$0xff]
        %v434 = vld [vmem:[#allocation2 + $0x30] sm:$0xff]
        %v435 = vld [vmem:[#allocation2 + $0x38] sm:$0xff]
        %v436 = vld [vmem:[#allocation2 + $0x40] sm:$0xff]
        %v437 = vld [vmem:[#allocation2 + $0x48] sm:$0xff]
        %v438 = vld [vmem:[#allocation2 + $0x50] sm:$0xff]
        %v439 = vld [vmem:[#allocation2 + $0x58] sm:$0xff]
        %v440 = vld [vmem:[#allocation2 + $0x60] sm:$0xff]
        %v441 = vld [vmem:[#allocation2 + $0x68] sm:$0xff]
        %v442 = vld [vmem:[#allocation2 + $0x70] sm:$0xff]
        %v443 = vld [vmem:[#allocation2 + $0x78] sm:$0xff]
        %v444 = vld [vmem:[#allocation2 + $0x80] sm:$0xff]
        %v445 = vld [vmem:[#allocation2 + $0x88] sm:$0xff]
        %v446 = vld [vmem:[#allocation2 + $0x90] sm:$0xff]
        %v447 = vld [vmem:[#allocation2 + $0x98] sm:$0xff]
        %v448 = vld [vmem:[#allocation2 + $0xa0] sm:$0xff]
        %v449 = vld [vmem:[#allocation2 + $0xa8] sm:$0xff]
        %v450 = vld [vmem:[#allocation2 + $0xb0] sm:$0xff]
        %v451 = vld [vmem:[#allocation2 + $0xb8] sm:$0xff]
        %v452 = vld [vmem:[#allocation2 + $0xc0] sm:$0xff]
        %v453 = vld [vmem:[#allocation2 + $0xc8] sm:$0xff]
        %v454 = vld [vmem:[#allocation2 + $0xd0] sm:$0xff]
        %v455 = vld [vmem:[#allocation2 + $0xd8] sm:$0xff]
        %v456 = vld [vmem:[#allocation2 + $0xe0] sm:$0xff]
        %v457 = vld [vmem:[#allocation2 + $0xe8] sm:$0xff]
        %v458 = vld [vmem:[#allocation2 + $0xf0] sm:$0xff]
        %v459 = vld [vmem:[#allocation2 + $0xf8] sm:$0xff]
        %v460 = vld [vmem:[#allocation2 + $0x100] sm:$0xff]
        %v461 = vld [vmem:[#allocation2 + $0x108] sm:$0xff]
        %v462 = vld [vmem:[#allocation2 + $0x110] sm:$0xff]
        %v463 = vld [vmem:[#allocation2 + $0x118] sm:$0xff]
        %v464 = vld [vmem:[#allocation2 + $0x120] sm:$0xff]
        %v465 = vld [vmem:[#allocation2 + $0x128] sm:$0xff]
        %v466 = vld [vmem:[#allocation2 + $0x130] sm:$0xff]
        %v467 = vld [vmem:[#allocation2 + $0x138] sm:$0xff]
        %v468 = vld [vmem:[#allocation2 + $0x140] sm:$0xff]
        %v469 = vld [vmem:[#allocation2 + $0x148] sm:$0xff]
        %v470 = vld [vmem:[#allocation2 + $0x150] sm:$0xff]
        %v471 = vld [vmem:[#allocation2 + $0x158] sm:$0xff]
        %v472 = vld [vmem:[#allocation2 + $0x160] sm:$0xff]
        %v473 = vld [vmem:[#allocation2 + $0x168] sm:$0xff]
        %v474 = vld [vmem:[#allocation2 + $0x170] sm:$0xff]
        %v475 = vld [vmem:[#allocation2 + $0x178] sm:$0xff]
        %v476 = vld [vmem:[#allocation2 + $0x180] sm:$0xff]
        %v477 = vld [vmem:[#allocation2 + $0x188] sm:$0xff]
        %v478 = vld [vmem:[#allocation2 + $0x190] sm:$0xff]
        %v479 = vld [vmem:[#allocation2 + $0x198] sm:$0xff]
        %v480 = vld [vmem:[#allocation2 + $0x1a0] sm:$0xff]
        %v481 = vld [vmem:[#allocation2 + $0x1a8] sm:$0xff]
        %v482 = vld [vmem:[#allocation2 + $0x1b0] sm:$0xff]
        %v483 = vld [vmem:[#allocation2 + $0x1b8] sm:$0xff]
        %v484 = vld [vmem:[#allocation2 + $0x1c0] sm:$0xff]
        %v485 = vld [vmem:[#allocation2 + $0x1c8] sm:$0xff]
        %v486 = vld [vmem:[#allocation2 + $0x1d0] sm:$0xff]
        %v487 = vld [vmem:[#allocation2 + $0x1d8] sm:$0xff]
        %v488 = vld [vmem:[#allocation2 + $0x1e0] sm:$0xff]
        %v489 = vld [vmem:[#allocation2 + $0x1e8] sm:$0xff]
        %v490 = vld [vmem:[#allocation2 + $0x1f0] sm:$0xff]
        %v491 = vld [vmem:[#allocation2 + $0x1f8] sm:$0xff]
        %v492 = vld [vmem:[#allocation2 + $0x200] sm:$0xff]
        %v493 = vld [vmem:[#allocation2 + $0x208] sm:$0xff]
        %v494 = vld [vmem:[#allocation2 + $0x210] sm:$0xff]
        %v495 = vld [vmem:[#allocation2 + $0x218] sm:$0xff]
        %v496 = vld [vmem:[#allocation2 + $0x220] sm:$0xff]
        %v497 = vld [vmem:[#allocation2 + $0x228] sm:$0xff]
        %v498 = vld [vmem:[#allocation2 + $0x230] sm:$0xff]
        %v499 = vld [vmem:[#allocation2 + $0x238] sm:$0xff]
        %v500 = vld [vmem:[#allocation2 + $0x240] sm:$0xff]
        %v501 = vld [vmem:[#allocation2 + $0x248] sm:$0xff]
        %v502 = vld [vmem:[#allocation2 + $0x250] sm:$0xff]
        %v503 = vld [vmem:[#allocation2 + $0x258] sm:$0xff]
        %v504 = vld [vmem:[#allocation2 + $0x260] sm:$0xff]
        %v505 = vld [vmem:[#allocation2 + $0x268] sm:$0xff]
        %v506 = vld [vmem:[#allocation2 + $0x270] sm:$0xff]
        %v507 = vld [vmem:[#allocation2 + $0x278] sm:$0xff]
        %v508 = vld [vmem:[#allocation2 + $0x280] sm:$0xff]
        %v509 = vld [vmem:[#allocation2 + $0x288] sm:$0xff]
        %v510 = vld [vmem:[#allocation2 + $0x290] sm:$0xff]
        %v511 = vld [vmem:[#allocation2 + $0x298] sm:$0xff]
        %v512 = vld [vmem:[#allocation2 + $0x2a0] sm:$0xff]
        %v513 = vld [vmem:[#allocation2 + $0x2a8] sm:$0xff]
        %v514 = vld [vmem:[#allocation2 + $0x2b0] sm:$0xff]
        %v515 = vld [vmem:[#allocation2 + $0x2b8] sm:$0xff]
        %v516 = vld [vmem:[#allocation2 + $0x2c0] sm:$0xff]
        %v517 = vld [vmem:[#allocation2 + $0x2c8] sm:$0xff]
        %v518 = vld [vmem:[#allocation2 + $0x2d0] sm:$0xff]
        %v519 = vld [vmem:[#allocation2 + $0x2d8] sm:$0xff]
        %v520 = vld [vmem:[#allocation2 + $0x2e0] sm:$0xff]
        %v521 = vld [vmem:[#allocation2 + $0x2e8] sm:$0xff]
        %v522 = vld [vmem:[#allocation2 + $0x2f0] sm:$0xff]
        %v523 = vld [vmem:[#allocation2 + $0x2f8] sm:$0xff]
        %v524 = vld [vmem:[#allocation2 + $0x300] sm:$0xff]
        %v525 = vld [vmem:[#allocation2 + $0x308] sm:$0xff]
        %v526 = vld [vmem:[#allocation2 + $0x310] sm:$0xff]
        %v527 = vld [vmem:[#allocation2 + $0x318] sm:$0xff]
        %v528 = vld [vmem:[#allocation2 + $0x320] sm:$0xff]
        %v529 = vld [vmem:[#allocation2 + $0x328] sm:$0xff]
        %v530 = vld [vmem:[#allocation2 + $0x330] sm:$0xff]
        %v531 = vld [vmem:[#allocation2 + $0x338] sm:$0xff]
        %v532 = vld [vmem:[#allocation2 + $0x340] sm:$0xff]
        %v533 = vld [vmem:[#allocation2 + $0x348] sm:$0xff]
        %v534 = vld [vmem:[#allocation2 + $0x350] sm:$0xff]
        %v535 = vld [vmem:[#allocation2 + $0x358] sm:$0xff]
        %v536 = vld [vmem:[#allocation3] sm:$0xf]
        %v537 = vld [vmem:[#allocation3 + $0x4] sm:$0xf]
        %v538 = vld [vmem:[#allocation3 + $0x8] sm:$0xf]
        %v539 = vld [vmem:[#allocation3 + $0xc] sm:$0xf]
        %v540 = vld [vmem:[#allocation3 + $0x10] sm:$0xf]
        %v541 = vld [vmem:[#allocation3 + $0x14] sm:$0xf]
        %v542 = vld [vmem:[#allocation3 + $0x18] sm:$0xf]
        %v543 = vld [vmem:[#allocation3 + $0x1c] sm:$0xf]
        %v544 = vld [vmem:[#allocation3 + $0x20] sm:$0xf]
        %v545 = vld [vmem:[#allocation3 + $0x24] sm:$0xf]
        %v546 = vld [vmem:[#allocation3 + $0x28] sm:$0xf]
        %v547 = vld [vmem:[#allocation3 + $0x2c] sm:$0xf]
        %v548 = vld [vmem:[#allocation3 + $0x30] sm:$0xf]
        %v549 = vld [vmem:[#allocation3 + $0x34] sm:$0xf]
        %v550 = vld [vmem:[#allocation3 + $0x38] sm:$0xf]
        %v551 = vld [vmem:[#allocation3 + $0x3c] sm:$0xf]
        %v552 = vld [vmem:[#allocation3 + $0x40] sm:$0xf]
        %v553 = vld [vmem:[#allocation3 + $0x44] sm:$0xf]
        %v554 = vld [vmem:[#allocation3 + $0x48] sm:$0xf]
        %v555 = vld [vmem:[#allocation3 + $0x4c] sm:$0xf]
        %v556 = vld [vmem:[#allocation3 + $0x50] sm:$0xf]
        %v557 = vld [vmem:[#allocation3 + $0x54] sm:$0xf]
        %v558 = vld [vmem:[#allocation3 + $0x58] sm:$0xf]
        %v559 = vld [vmem:[#allocation3 + $0x5c] sm:$0xf]
        %v560 = vld [vmem:[#allocation3 + $0x60] sm:$0xf]
        %v561 = vld [vmem:[#allocation3 + $0x64] sm:$0xf]
        %v562 = vld [vmem:[#allocation3 + $0x68] sm:$0xf]
        %v563 = vld [vmem:[#allocation3 + $0x6c] sm:$0xf]
        %v564 = vld [vmem:[#allocation3 + $0x70] sm:$0xf]
        %v565 = vld [vmem:[#allocation3 + $0x74] sm:$0xf]
        %v566 = vld [vmem:[#allocation3 + $0x78] sm:$0xf]
        %v567 = vld [vmem:[#allocation3 + $0x7c] sm:$0xf]
        %v568 = vld [vmem:[#allocation3 + $0x80] sm:$0xf]
        %v569 = vld [vmem:[#allocation3 + $0x84] sm:$0xf]
        %v570 = vld [vmem:[#allocation3 + $0x88] sm:$0xf]
        %v571 = vld [vmem:[#allocation3 + $0x8c] sm:$0xf]
        %v572 = vld [vmem:[#allocation3 + $0x90] sm:$0xf]
        %v573 = vld [vmem:[#allocation3 + $0x94] sm:$0xf]
        %v574 = vld [vmem:[#allocation3 + $0x98] sm:$0xf]
        %v575 = vld [vmem:[#allocation3 + $0x9c] sm:$0xf]
        %v576 = vld [vmem:[#allocation3 + $0xa0] sm:$0xf]
        %v577 = vld [vmem:[#allocation3 + $0xa4] sm:$0xf]
        %v578 = vld [vmem:[#allocation3 + $0xa8] sm:$0xf]
        %v579 = vld [vmem:[#allocation3 + $0xac] sm:$0xf]
        %v580 = vld [vmem:[#allocation3 + $0xb0] sm:$0xf]
        %v581 = vld [vmem:[#allocation3 + $0xb4] sm:$0xf]
        %v582 = vld [vmem:[#allocation3 + $0xb8] sm:$0xf]
        %v583 = vld [vmem:[#allocation3 + $0xbc] sm:$0xf]
        %v584 = vld [vmem:[#allocation3 + $0xc0] sm:$0xf]
        %v585 = vld [vmem:[#allocation3 + $0xc4] sm:$0xf]
        %v586 = vld [vmem:[#allocation3 + $0xc8] sm:$0xf]
        %v587 = vld [vmem:[#allocation3 + $0xcc] sm:$0xf]
        %v588 = vld [vmem:[#allocation3 + $0xd0] sm:$0xf]
        %v589 = vld [vmem:[#allocation3 + $0xd4] sm:$0xf]
        %v590 = vld [vmem:[%s263] sm:$0xff]
        %v591 = vld [vmem:[%s263 + $0x8] sm:$0xff]
        %v592 = vld [vmem:[%s263 + $0x10] sm:$0xff]
        %v593 = vld [vmem:[%s263 + $0x18] sm:$0xff]
        %v594 = vld [vmem:[%s263 + $0x20] sm:$0xff]
        %v595 = vld [vmem:[%s263 + $0x28] sm:$0xff]
        %v596 = vld [vmem:[%s263 + $0x30] sm:$0xff]
        %v597 = vld [vmem:[%s263 + $0x38] sm:$0xff]
        %v598 = vld [vmem:[%s263 + $0x40] sm:$0xff]
        %v599 = vld [vmem:[%s263 + $0x48] sm:$0xff]
        %v600 = vld [vmem:[%s263 + $0x50] sm:$0xff]
        %v601 = vld [vmem:[%s263 + $0x58] sm:$0xff]
        %v602 = vld [vmem:[%s263 + $0x60] sm:$0xff]
        %v603 = vld [vmem:[%s263 + $0x68] sm:$0xff]
        %v604 = vld [vmem:[%s263 + $0x70] sm:$0xff]
        %v605 = vld [vmem:[%s263 + $0x78] sm:$0xff]
        %v660 = vunpack.c.l.b16 %v536
        %v661 = vunpack.c.l.b16 %v537
        %v662 = vunpack.c.l.b16 %v538
        %v663 = vunpack.c.l.b16 %v539
        %v664 = vunpack.c.l.b16 %v540
        %v665 = vunpack.c.l.b16 %v541
        %v666 = vunpack.c.l.b16 %v542
        %v667 = vunpack.c.l.b16 %v543
        %v668 = vunpack.c.l.b16 %v544
        %v669 = vunpack.c.l.b16 %v545
        %v670 = vunpack.c.l.b16 %v546
        %v671 = vunpack.c.l.b16 %v547
        %v672 = vunpack.c.l.b16 %v548
        %v673 = vunpack.c.l.b16 %v549
        %v674 = vunpack.c.l.b16 %v550
        %v675 = vunpack.c.l.b16 %v551
        %v676 = vunpack.c.l.b16 %v552
        %v677 = vunpack.c.l.b16 %v553
        %v678 = vunpack.c.l.b16 %v554
        %v679 = vunpack.c.l.b16 %v555
        %v680 = vunpack.c.l.b16 %v556
        %v681 = vunpack.c.l.b16 %v557
        %v682 = vunpack.c.l.b16 %v558
        %v683 = vunpack.c.l.b16 %v559
        %v684 = vunpack.c.l.b16 %v560
        %v685 = vunpack.c.l.b16 %v561
        %v686 = vunpack.c.l.b16 %v562
        %v687 = vunpack.c.l.b16 %v563
        %v688 = vunpack.c.l.b16 %v564
        %v689 = vunpack.c.l.b16 %v565
        %v690 = vunpack.c.l.b16 %v566
        %v691 = vunpack.c.l.b16 %v567
        %v692 = vunpack.c.l.b16 %v568
        %v693 = vunpack.c.l.b16 %v569
        %v694 = vunpack.c.l.b16 %v570
        %v695 = vunpack.c.l.b16 %v571
        %v696 = vunpack.c.l.b16 %v572
        %v697 = vunpack.c.l.b16 %v573
        %v698 = vunpack.c.l.b16 %v574
        %v699 = vunpack.c.l.b16 %v575
        %v700 = vunpack.c.l.b16 %v576
        %v701 = vunpack.c.l.b16 %v577
        %v702 = vunpack.c.l.b16 %v578
        %v703 = vunpack.c.l.b16 %v579
        %v704 = vunpack.c.l.b16 %v580
        %v705 = vunpack.c.l.b16 %v581
        %v706 = vunpack.c.l.b16 %v582
        %v707 = vunpack.c.l.b16 %v583
        %v708 = vunpack.c.l.b16 %v584
        %v709 = vunpack.c.l.b16 %v585
        %v710 = vunpack.c.l.b16 %v586
        %v711 = vunpack.c.l.b16 %v587
        %v712 = vunpack.c.l.b16 %v588
        %v713 = vunpack.c.l.b16 %v589
        %v714 = vpack.c.b16 %v661, %v660
        %v715 = vpack.c.b16 %v663, %v662
        %v716 = vpack.c.b16 %v665, %v664
        %v717 = vpack.c.b16 %v667, %v666
        %v718 = vpack.c.b16 %v669, %v668
        %v719 = vpack.c.b16 %v671, %v670
        %v720 = vpack.c.b16 %v673, %v672
        %v721 = vpack.c.b16 %v675, %v674
        %v722 = vpack.c.b16 %v677, %v676
        %v723 = vpack.c.b16 %v679, %v678
        %v724 = vpack.c.b16 %v681, %v680
        %v725 = vpack.c.b16 %v683, %v682
        %v726 = vpack.c.b16 %v685, %v684
        %v727 = vpack.c.b16 %v687, %v686
        %v728 = vpack.c.b16 %v689, %v688
        %v729 = vpack.c.b16 %v691, %v690
        %v730 = vpack.c.b16 %v693, %v692
        %v731 = vpack.c.b16 %v695, %v694
        %v732 = vpack.c.b16 %v697, %v696
        %v733 = vpack.c.b16 %v699, %v698
        %v734 = vpack.c.b16 %v701, %v700
        %v735 = vpack.c.b16 %v703, %v702
        %v736 = vpack.c.b16 %v705, %v704
        %v737 = vpack.c.b16 %v707, %v706
        %v738 = vpack.c.b16 %v709, %v708
        %v739 = vpack.c.b16 %v711, %v710
        %v740 = vpack.c.b16 %v713, %v712
        %v784 = vunpack.c.l.b16 %v590
        %v785 = vunpack.c.h.b16 %v590
        %v786 = vunpack.c.l.b16 %v591
        %v787 = vunpack.c.h.b16 %v591
        %v788 = vunpack.c.l.b16 %v592
        %v789 = vunpack.c.h.b16 %v592
        %v790 = vunpack.c.l.b16 %v593
        %v791 = vunpack.c.h.b16 %v593
        %v792 = vunpack.c.l.b16 %v594
        %v793 = vunpack.c.h.b16 %v594
        %v794 = vunpack.c.l.b16 %v595
        %v795 = vunpack.c.h.b16 %v595
        %v796 = vunpack.c.l.b16 %v596
        %v797 = vunpack.c.h.b16 %v596
        %v798 = vunpack.c.l.b16 %v597
        %v799 = vunpack.c.h.b16 %v597
        %v800 = vunpack.c.l.b16 %v598
        %v801 = vunpack.c.h.b16 %v598
        %v802 = vunpack.c.l.b16 %v599
        %v803 = vunpack.c.h.b16 %v599
        %v804 = vunpack.c.l.b16 %v600
        %v805 = vunpack.c.h.b16 %v600
        %v806 = vunpack.c.l.b16 %v601
        %v807 = vunpack.c.h.b16 %v601
        %v808 = vunpack.c.l.b16 %v602
        %v809 = vunpack.c.h.b16 %v602
        %v810 = vunpack.c.l.b16 %v603
        %v811 = vunpack.c.h.b16 %v603
        %v812 = vunpack.c.l.b16 %v604
        %v813 = vunpack.c.h.b16 %v604
        %v814 = vunpack.c.l.b16 %v605
        %v815 = vunpack.c.h.b16 %v605
        %v816 = vpack.c.b16 %v786, %v784
        %v817 = vpack.c.b16 %v787, %v785
        %v818 = vpack.c.b16 %v790, %v788
        %v819 = vpack.c.b16 %v791, %v789
        %v820 = vpack.c.b16 %v794, %v792
        %v821 = vpack.c.b16 %v795, %v793
        %v822 = vpack.c.b16 %v798, %v796
        %v823 = vpack.c.b16 %v799, %v797
        %v824 = vpack.c.b16 %v802, %v800
        %v825 = vpack.c.b16 %v803, %v801
        %v826 = vpack.c.b16 %v806, %v804
        %v827 = vpack.c.b16 %v807, %v805
        %v828 = vpack.c.b16 %v810, %v808
        %v829 = vpack.c.b16 %v811, %v809
        %v830 = vpack.c.b16 %v814, %v812
        %v831 = vpack.c.b16 %v815, %v813
        %848 = vmatprep.subr.bf16.mxu0 %v817
        %849 = vmatpush1.bf16.msra.mxu0 %v816
        %850 = vmatprep.subr.bf16.mxu0 %v819
        %851 = vmatpush1.bf16.msra.mxu0 %v818
        %852 = vmatprep.subr.bf16.mxu0 %v821
        %853 = vmatpush1.bf16.msra.mxu0 %v820
        %854 = vmatprep.subr.bf16.mxu0 %v823
        %855 = vmatpush1.bf16.msra.mxu0 %v822
        %856 = vmatprep.subr.bf16.mxu0 %v825
        %857 = vmatpush1.bf16.msra.mxu0 %v824
        %858 = vmatprep.subr.bf16.mxu0 %v827
        %859 = vmatpush1.bf16.msra.mxu0 %v826
        %860 = vmatprep.subr.bf16.mxu0 %v829
        %861 = vmatpush1.bf16.msra.mxu0 %v828
        %862 = vmatprep.subr.bf16.mxu0 %v831
        %863 = vmatpush1.bf16.msra.mxu0 %v830
        %864 = vmatprep.subr.bf16.mxu0 0
        %865 = vmatpush1.bf16.msra.mxu0 0
        %866 = vmatprep.subr.bf16.mxu0 0
        %867 = vmatpush1.bf16.msra.mxu0 0
        %868 = vmatprep.subr.bf16.mxu0 0
        %869 = vmatpush1.bf16.msra.mxu0 0
        %870 = vmatprep.subr.bf16.mxu0 0
        %871 = vmatpush1.bf16.msra.mxu0 0
        %872 = vmatprep.subr.bf16.mxu0 0
        %873 = vmatpush1.bf16.msra.mxu0 0
        %874 = vmatprep.subr.bf16.mxu0 0
        %875 = vmatpush1.bf16.msra.mxu0 0
        %876 = vmatprep.subr.bf16.mxu0 0
        %877 = vmatpush1.bf16.msra.mxu0 0
        %878 = vmatprep.subr.bf16.mxu0 0
        %879 = vmatpush1.bf16.msra.mxu0 0
        %880 = vmatprep.mubr.bf16.mxu0 0
        %881 = vmatmul.mubr.bf16.gmra.mrb[0].mxu0 %v714
        %v882 = vpop.f32.mrb[0].mxu0
        %v883 = vadd.f32 0.0, %v882
        %v884 = vpop.f32.mrb[0].mxu0
        %v885 = vadd.f32 0.0, %v884
        %v886 = vpop.f32.mrb[0].mxu0
        %v887 = vadd.f32 0.0, %v886
        %v888 = vpop.f32.mrb[0].mxu0
        %v889 = vadd.f32 0.0, %v888
        %890 = vmatprep.mubr.bf16.mxu0 0
        %891 = vmatmul.mubr.bf16.gmra.mrb[0].mxu0 %v715
        %v892 = vpop.f32.mrb[0].mxu0
        %v893 = vadd.f32 0.0, %v892
        %v894 = vpop.f32.mrb[0].mxu0
        %v895 = vadd.f32 0.0, %v894
        %v896 = vpop.f32.mrb[0].mxu0
        %v897 = vadd.f32 0.0, %v896
        %v898 = vpop.f32.mrb[0].mxu0
        %v899 = vadd.f32 0.0, %v898
        %900 = vmatprep.mubr.bf16.mxu0 0
        %901 = vmatmul.mubr.bf16.gmra.mrb[0].mxu0 %v716
        %v902 = vpop.f32.mrb[0].mxu0
        %v903 = vadd.f32 0.0, %v902
        %v904 = vpop.f32.mrb[0].mxu0
        %v905 = vadd.f32 0.0, %v904
        %v906 = vpop.f32.mrb[0].mxu0
        %v907 = vadd.f32 0.0, %v906
        %v908 = vpop.f32.mrb[0].mxu0
        %v909 = vadd.f32 0.0, %v908
        %910 = vmatprep.mubr.bf16.mxu0 0
        %911 = vmatmul.mubr.bf16.gmra.mrb[0].mxu0 %v717
        %v912 = vpop.f32.mrb[0].mxu0
        %v913 = vadd.f32 0.0, %v912
        %v914 = vpop.f32.mrb[0].mxu0
        %v915 = vadd.f32 0.0, %v914
        %v916 = vpop.f32.mrb[0].mxu0
        %v917 = vadd.f32 0.0, %v916
        %v918 = vpop.f32.mrb[0].mxu0
        %v919 = vadd.f32 0.0, %v918
        %920 = vmatprep.mubr.bf16.mxu0 0
        %921 = vmatmul.mubr.bf16.gmra.mrb[0].mxu0 %v718
        %v922 = vpop.f32.mrb[0].mxu0
        %v923 = vadd.f32 0.0, %v922
        %v924 = vpop.f32.mrb[0].mxu0
        %v925 = vadd.f32 0.0, %v924
        %v926 = vpop.f32.mrb[0].mxu0
        %v927 = vadd.f32 0.0, %v926
        %v928 = vpop.f32.mrb[0].mxu0
        %v929 = vadd.f32 0.0, %v928
        %930 = vmatprep.mubr.bf16.mxu0 0
        %931 = vmatmul.mubr.bf16.gmra.mrb[0].mxu0 %v719
        %v932 = vpop.f32.mrb[0].mxu0
        %v933 = vadd.f32 0.0, %v932
        %v934 = vpop.f32.mrb[0].mxu0
        %v935 = vadd.f32 0.0, %v934
        %v936 = vpop.f32.mrb[0].mxu0
        %v937 = vadd.f32 0.0, %v936
        %v938 = vpop.f32.mrb[0].mxu0
        %v939 = vadd.f32 0.0, %v938
        %940 = vmatprep.mubr.bf16.mxu0 0
        %941 = vmatmul.mubr.bf16.gmra.mrb[0].mxu0 %v720
        %v942 = vpop.f32.mrb[0].mxu0
        %v943 = vadd.f32 0.0, %v942
        %v944 = vpop.f32.mrb[0].mxu0
        %v945 = vadd.f32 0.0, %v944
        %v946 = vpop.f32.mrb[0].mxu0
        %v947 = vadd.f32 0.0, %v946
        %v948 = vpop.f32.mrb[0].mxu0
        %v949 = vadd.f32 0.0, %v948
        %950 = vmatprep.mubr.bf16.mxu0 0
        %951 = vmatmul.mubr.bf16.gmra.mrb[0].mxu0 %v721
        %v952 = vpop.f32.mrb[0].mxu0
        %v953 = vadd.f32 0.0, %v952
        %v954 = vpop.f32.mrb[0].mxu0
        %v955 = vadd.f32 0.0, %v954
        %v956 = vpop.f32.mrb[0].mxu0
        %v957 = vadd.f32 0.0, %v956
        %v958 = vpop.f32.mrb[0].mxu0
        %v959 = vadd.f32 0.0, %v958
        %960 = vmatprep.mubr.bf16.mxu0 0
        %961 = vmatmul.mubr.bf16.gmra.mrb[0].mxu0 %v722
        %v962 = vpop.f32.mrb[0].mxu0
        %v963 = vadd.f32 0.0, %v962
        %v964 = vpop.f32.mrb[0].mxu0
        %v965 = vadd.f32 0.0, %v964
        %v966 = vpop.f32.mrb[0].mxu0
        %v967 = vadd.f32 0.0, %v966
        %v968 = vpop.f32.mrb[0].mxu0
        %v969 = vadd.f32 0.0, %v968
        %970 = vmatprep.mubr.bf16.mxu0 0
        %971 = vmatmul.mubr.bf16.gmra.mrb[0].mxu0 %v723
        %v972 = vpop.f32.mrb[0].mxu0
        %v973 = vadd.f32 0.0, %v972
        %v974 = vpop.f32.mrb[0].mxu0
        %v975 = vadd.f32 0.0, %v974
        %v976 = vpop.f32.mrb[0].mxu0
        %v977 = vadd.f32 0.0, %v976
        %v978 = vpop.f32.mrb[0].mxu0
        %v979 = vadd.f32 0.0, %v978
        %980 = vmatprep.mubr.bf16.mxu0 0
        %981 = vmatmul.mubr.bf16.gmra.mrb[0].mxu0 %v724
        %v982 = vpop.f32.mrb[0].mxu0
        %v983 = vadd.f32 0.0, %v982
        %v984 = vpop.f32.mrb[0].mxu0
        %v985 = vadd.f32 0.0, %v984
        %v986 = vpop.f32.mrb[0].mxu0
        %v987 = vadd.f32 0.0, %v986
        %v988 = vpop.f32.mrb[0].mxu0
        %v989 = vadd.f32 0.0, %v988
        %990 = vmatprep.mubr.bf16.mxu0 0
        %991 = vmatmul.mubr.bf16.gmra.mrb[0].mxu0 %v725
        %v992 = vpop.f32.mrb[0].mxu0
        %v993 = vadd.f32 0.0, %v992
        %v994 = vpop.f32.mrb[0].mxu0
        %v995 = vadd.f32 0.0, %v994
        %v996 = vpop.f32.mrb[0].mxu0
        %v997 = vadd.f32 0.0, %v996
        %v998 = vpop.f32.mrb[0].mxu0
        %v999 = vadd.f32 0.0, %v998
        %1000 = vmatprep.mubr.bf16.mxu0 0
        %1001 = vmatmul.mubr.bf16.gmra.mrb[0].mxu0 %v726
        %v1002 = vpop.f32.mrb[0].mxu0
        %v1003 = vadd.f32 0.0, %v1002
        %v1004 = vpop.f32.mrb[0].mxu0
        %v1005 = vadd.f32 0.0, %v1004
        %v1006 = vpop.f32.mrb[0].mxu0
        %v1007 = vadd.f32 0.0, %v1006
        %v1008 = vpop.f32.mrb[0].mxu0
        %v1009 = vadd.f32 0.0, %v1008
        %1010 = vmatprep.mubr.bf16.mxu0 0
        %1011 = vmatmul.mubr.bf16.gmra.mrb[0].mxu0 %v727
        %v1012 = vpop.f32.mrb[0].mxu0
        %v1013 = vadd.f32 0.0, %v1012
        %v1014 = vpop.f32.mrb[0].mxu0
        %v1015 = vadd.f32 0.0, %v1014
        %v1016 = vpop.f32.mrb[0].mxu0
        %v1017 = vadd.f32 0.0, %v1016
        %v1018 = vpop.f32.mrb[0].mxu0
        %v1019 = vadd.f32 0.0, %v1018
        %1020 = vmatprep.mubr.bf16.mxu0 0
        %1021 = vmatmul.mubr.bf16.gmra.mrb[0].mxu0 %v728
        %v1022 = vpop.f32.mrb[0].mxu0
        %v1023 = vadd.f32 0.0, %v1022
        %v1024 = vpop.f32.mrb[0].mxu0
        %v1025 = vadd.f32 0.0, %v1024
        %v1026 = vpop.f32.mrb[0].mxu0
        %v1027 = vadd.f32 0.0, %v1026
        %v1028 = vpop.f32.mrb[0].mxu0
        %v1029 = vadd.f32 0.0, %v1028
        %1030 = vmatprep.mubr.bf16.mxu0 0
        %1031 = vmatmul.mubr.bf16.gmra.mrb[0].mxu0 %v729
        %v1032 = vpop.f32.mrb[0].mxu0
        %v1033 = vadd.f32 0.0, %v1032
        %v1034 = vpop.f32.mrb[0].mxu0
        %v1035 = vadd.f32 0.0, %v1034
        %v1036 = vpop.f32.mrb[0].mxu0
        %v1037 = vadd.f32 0.0, %v1036
        %v1038 = vpop.f32.mrb[0].mxu0
        %v1039 = vadd.f32 0.0, %v1038
        %1040 = vmatprep.mubr.bf16.mxu0 0
        %1041 = vmatmul.mubr.bf16.gmra.mrb[0].mxu0 %v730
        %v1042 = vpop.f32.mrb[0].mxu0
        %v1043 = vadd.f32 0.0, %v1042
        %v1044 = vpop.f32.mrb[0].mxu0
        %v1045 = vadd.f32 0.0, %v1044
        %v1046 = vpop.f32.mrb[0].mxu0
        %v1047 = vadd.f32 0.0, %v1046
        %v1048 = vpop.f32.mrb[0].mxu0
        %v1049 = vadd.f32 0.0, %v1048
        %1050 = vmatprep.mubr.bf16.mxu0 0
        %1051 = vmatmul.mubr.bf16.gmra.mrb[0].mxu0 %v731
        %v1052 = vpop.f32.mrb[0].mxu0
        %v1053 = vadd.f32 0.0, %v1052
        %v1054 = vpop.f32.mrb[0].mxu0
        %v1055 = vadd.f32 0.0, %v1054
        %v1056 = vpop.f32.mrb[0].mxu0
        %v1057 = vadd.f32 0.0, %v1056
        %v1058 = vpop.f32.mrb[0].mxu0
        %v1059 = vadd.f32 0.0, %v1058
        %1060 = vmatprep.mubr.bf16.mxu0 0
        %1061 = vmatmul.mubr.bf16.gmra.mrb[0].mxu0 %v732
        %v1062 = vpop.f32.mrb[0].mxu0
        %v1063 = vadd.f32 0.0, %v1062
        %v1064 = vpop.f32.mrb[0].mxu0
        %v1065 = vadd.f32 0.0, %v1064
        %v1066 = vpop.f32.mrb[0].mxu0
        %v1067 = vadd.f32 0.0, %v1066
        %v1068 = vpop.f32.mrb[0].mxu0
        %v1069 = vadd.f32 0.0, %v1068
        %1070 = vmatprep.mubr.bf16.mxu0 0
        %1071 = vmatmul.mubr.bf16.gmra.mrb[0].mxu0 %v733
        %v1072 = vpop.f32.mrb[0].mxu0
        %v1073 = vadd.f32 0.0, %v1072
        %v1074 = vpop.f32.mrb[0].mxu0
        %v1075 = vadd.f32 0.0, %v1074
        %v1076 = vpop.f32.mrb[0].mxu0
        %v1077 = vadd.f32 0.0, %v1076
        %v1078 = vpop.f32.mrb[0].mxu0
        %v1079 = vadd.f32 0.0, %v1078
        %1080 = vmatprep.mubr.bf16.mxu0 0
        %1081 = vmatmul.mubr.bf16.gmra.mrb[0].mxu0 %v734
        %v1082 = vpop.f32.mrb[0].mxu0
        %v1083 = vadd.f32 0.0, %v1082
        %v1084 = vpop.f32.mrb[0].mxu0
        %v1085 = vadd.f32 0.0, %v1084
        %v1086 = vpop.f32.mrb[0].mxu0
        %v1087 = vadd.f32 0.0, %v1086
        %v1088 = vpop.f32.mrb[0].mxu0
        %v1089 = vadd.f32 0.0, %v1088
        %1090 = vmatprep.mubr.bf16.mxu0 0
        %1091 = vmatmul.mubr.bf16.gmra.mrb[0].mxu0 %v735
        %v1092 = vpop.f32.mrb[0].mxu0
        %v1093 = vadd.f32 0.0, %v1092
        %v1094 = vpop.f32.mrb[0].mxu0
        %v1095 = vadd.f32 0.0, %v1094
        %v1096 = vpop.f32.mrb[0].mxu0
        %v1097 = vadd.f32 0.0, %v1096
        %v1098 = vpop.f32.mrb[0].mxu0
        %v1099 = vadd.f32 0.0, %v1098
        %1100 = vmatprep.mubr.bf16.mxu0 0
        %1101 = vmatmul.mubr.bf16.gmra.mrb[0].mxu0 %v736
        %v1102 = vpop.f32.mrb[0].mxu0
        %v1103 = vadd.f32 0.0, %v1102
        %v1104 = vpop.f32.mrb[0].mxu0
        %v1105 = vadd.f32 0.0, %v1104
        %v1106 = vpop.f32.mrb[0].mxu0
        %v1107 = vadd.f32 0.0, %v1106
        %v1108 = vpop.f32.mrb[0].mxu0
        %v1109 = vadd.f32 0.0, %v1108
        %1110 = vmatprep.mubr.bf16.mxu0 0
        %1111 = vmatmul.mubr.bf16.gmra.mrb[0].mxu0 %v737
        %v1112 = vpop.f32.mrb[0].mxu0
        %v1113 = vadd.f32 0.0, %v1112
        %v1114 = vpop.f32.mrb[0].mxu0
        %v1115 = vadd.f32 0.0, %v1114
        %v1116 = vpop.f32.mrb[0].mxu0
        %v1117 = vadd.f32 0.0, %v1116
        %v1118 = vpop.f32.mrb[0].mxu0
        %v1119 = vadd.f32 0.0, %v1118
        %1120 = vmatprep.mubr.bf16.mxu0 0
        %1121 = vmatmul.mubr.bf16.gmra.mrb[0].mxu0 %v738
        %v1122 = vpop.f32.mrb[0].mxu0
        %v1123 = vadd.f32 0.0, %v1122
        %v1124 = vpop.f32.mrb[0].mxu0
        %v1125 = vadd.f32 0.0, %v1124
        %v1126 = vpop.f32.mrb[0].mxu0
        %v1127 = vadd.f32 0.0, %v1126
        %v1128 = vpop.f32.mrb[0].mxu0
        %v1129 = vadd.f32 0.0, %v1128
        %1130 = vmatprep.mubr.bf16.mxu0 0
        %1131 = vmatmul.mubr.bf16.gmra.mrb[0].mxu0 %v739
        %v1132 = vpop.f32.mrb[0].mxu0
        %v1133 = vadd.f32 0.0, %v1132
        %v1134 = vpop.f32.mrb[0].mxu0
        %v1135 = vadd.f32 0.0, %v1134
        %v1136 = vpop.f32.mrb[0].mxu0
        %v1137 = vadd.f32 0.0, %v1136
        %v1138 = vpop.f32.mrb[0].mxu0
        %v1139 = vadd.f32 0.0, %v1138
        %1140 = vmatprep.mubr.bf16.mxu0 0
        %1141 = vmatmul.mubr.bf16.gmra.mrb[0].mxu0 %v740
        %v1142 = vpop.f32.mrb[0].mxu0
        %v1143 = vadd.f32 0.0, %v1142
        %v1144 = vpop.f32.mrb[0].mxu0
        %v1145 = vadd.f32 0.0, %v1144
        %v1146 = vpop.f32.mrb[0].mxu0
        %v1147 = vadd.f32 0.0, %v1146
        %v1148 = vpop.f32.mrb[0].mxu0
        %v1149 = vadd.f32 0.0, %v1148
        %1150 = vdwg.mxu0
        %v1151 = vadd.f32 %v428, %v883
        %v1152 = vadd.f32 %v429, %v885
        %v1153 = vadd.f32 %v430, %v887
        %v1154 = vadd.f32 %v431, %v889
        %v1155 = vadd.f32 %v432, %v893
        %v1156 = vadd.f32 %v433, %v895
        %v1157 = vadd.f32 %v434, %v897
        %v1158 = vadd.f32 %v435, %v899
        %v1159 = vadd.f32 %v436, %v903
        %v1160 = vadd.f32 %v437, %v905
        %v1161 = vadd.f32 %v438, %v907
        %v1162 = vadd.f32 %v439, %v909
        %v1163 = vadd.f32 %v440, %v913
        %v1164 = vadd.f32 %v441, %v915
        %v1165 = vadd.f32 %v442, %v917
        %v1166 = vadd.f32 %v443, %v919
        %v1167 = vadd.f32 %v444, %v923
        %v1168 = vadd.f32 %v445, %v925
        %v1169 = vadd.f32 %v446, %v927
        %v1170 = vadd.f32 %v447, %v929
        %v1171 = vadd.f32 %v448, %v933
        %v1172 = vadd.f32 %v449, %v935
        %v1173 = vadd.f32 %v450, %v937
        %v1174 = vadd.f32 %v451, %v939
        %v1175 = vadd.f32 %v452, %v943
        %v1176 = vadd.f32 %v453, %v945
        %v1177 = vadd.f32 %v454, %v947
        %v1178 = vadd.f32 %v455, %v949
        %v1179 = vadd.f32 %v456, %v953
        %v1180 = vadd.f32 %v457, %v955
        %v1181 = vadd.f32 %v458, %v957
        %v1182 = vadd.f32 %v459, %v959
        %v1183 = vadd.f32 %v460, %v963
        %v1184 = vadd.f32 %v461, %v965
        %v1185 = vadd.f32 %v462, %v967
        %v1186 = vadd.f32 %v463, %v969
        %v1187 = vadd.f32 %v464, %v973
        %v1188 = vadd.f32 %v465, %v975
        %v1189 = vadd.f32 %v466, %v977
        %v1190 = vadd.f32 %v467, %v979
        %v1191 = vadd.f32 %v468, %v983
        %v1192 = vadd.f32 %v469, %v985
        %v1193 = vadd.f32 %v470, %v987
        %v1194 = vadd.f32 %v471, %v989
        %v1195 = vadd.f32 %v472, %v993
        %v1196 = vadd.f32 %v473, %v995
        %v1197 = vadd.f32 %v474, %v997
        %v1198 = vadd.f32 %v475, %v999
        %v1199 = vadd.f32 %v476, %v1003
        %v1200 = vadd.f32 %v477, %v1005
        %v1201 = vadd.f32 %v478, %v1007
        %v1202 = vadd.f32 %v479, %v1009
        %v1203 = vadd.f32 %v480, %v1013
        %v1204 = vadd.f32 %v481, %v1015
        %v1205 = vadd.f32 %v482, %v1017
        %v1206 = vadd.f32 %v483, %v1019
        %v1207 = vadd.f32 %v484, %v1023
        %v1208 = vadd.f32 %v485, %v1025
        %v1209 = vadd.f32 %v486, %v1027
        %v1210 = vadd.f32 %v487, %v1029
        %v1211 = vadd.f32 %v488, %v1033
        %v1212 = vadd.f32 %v489, %v1035
        %v1213 = vadd.f32 %v490, %v1037
        %v1214 = vadd.f32 %v491, %v1039
        %v1215 = vadd.f32 %v492, %v1043
        %v1216 = vadd.f32 %v493, %v1045
        %v1217 = vadd.f32 %v494, %v1047
        %v1218 = vadd.f32 %v495, %v1049
        %v1219 = vadd.f32 %v496, %v1053
        %v1220 = vadd.f32 %v497, %v1055
        %v1221 = vadd.f32 %v498, %v1057
        %v1222 = vadd.f32 %v499, %v1059
        %v1223 = vadd.f32 %v500, %v1063
        %v1224 = vadd.f32 %v501, %v1065
        %v1225 = vadd.f32 %v502, %v1067
        %v1226 = vadd.f32 %v503, %v1069
        %v1227 = vadd.f32 %v504, %v1073
        %v1228 = vadd.f32 %v505, %v1075
        %v1229 = vadd.f32 %v506, %v1077
        %v1230 = vadd.f32 %v507, %v1079
        %v1231 = vadd.f32 %v508, %v1083
        %v1232 = vadd.f32 %v509, %v1085
        %v1233 = vadd.f32 %v510, %v1087
        %v1234 = vadd.f32 %v511, %v1089
        %v1235 = vadd.f32 %v512, %v1093
        %v1236 = vadd.f32 %v513, %v1095
        %v1237 = vadd.f32 %v514, %v1097
        %v1238 = vadd.f32 %v515, %v1099
        %v1239 = vadd.f32 %v516, %v1103
        %v1240 = vadd.f32 %v517, %v1105
        %v1241 = vadd.f32 %v518, %v1107
        %v1242 = vadd.f32 %v519, %v1109
        %v1243 = vadd.f32 %v520, %v1113
        %v1244 = vadd.f32 %v521, %v1115
        %v1245 = vadd.f32 %v522, %v1117
        %v1246 = vadd.f32 %v523, %v1119
        %v1247 = vadd.f32 %v524, %v1123
        %v1248 = vadd.f32 %v525, %v1125
        %v1249 = vadd.f32 %v526, %v1127
        %v1250 = vadd.f32 %v527, %v1129
        %v1251 = vadd.f32 %v528, %v1133
        %v1252 = vadd.f32 %v529, %v1135
        %v1253 = vadd.f32 %v530, %v1137
        %v1254 = vadd.f32 %v531, %v1139
        %v1255 = vadd.f32 %v532, %v1143
        %v1256 = vadd.f32 %v533, %v1145
        %v1257 = vadd.f32 %v534, %v1147
        %v1258 = vadd.f32 %v535, %v1149
        %1259 = vst [vmem:[#allocation2] sm:$0xff] %v1151
        %1260 = vst [vmem:[#allocation2 + $0x8] sm:$0xff] %v1152
        %1261 = vst [vmem:[#allocation2 + $0x10] sm:$0xff] %v1153
        %1262 = vst [vmem:[#allocation2 + $0x18] sm:$0xff] %v1154
        %1263 = vst [vmem:[#allocation2 + $0x20] sm:$0xff] %v1155
        %1264 = vst [vmem:[#allocation2 + $0x28] sm:$0xff] %v1156
        %1265 = vst [vmem:[#allocation2 + $0x30] sm:$0xff] %v1157
        %1266 = vst [vmem:[#allocation2 + $0x38] sm:$0xff] %v1158
        %1267 = vst [vmem:[#allocation2 + $0x40] sm:$0xff] %v1159
        %1268 = vst [vmem:[#allocation2 + $0x48] sm:$0xff] %v1160
        %1269 = vst [vmem:[#allocation2 + $0x50] sm:$0xff] %v1161
        %1270 = vst [vmem:[#allocation2 + $0x58] sm:$0xff] %v1162
        %1271 = vst [vmem:[#allocation2 + $0x60] sm:$0xff] %v1163
        %1272 = vst [vmem:[#allocation2 + $0x68] sm:$0xff] %v1164
        %1273 = vst [vmem:[#allocation2 + $0x70] sm:$0xff] %v1165
        %1274 = vst [vmem:[#allocation2 + $0x78] sm:$0xff] %v1166
        %1275 = vst [vmem:[#allocation2 + $0x80] sm:$0xff] %v1167
        %1276 = vst [vmem:[#allocation2 + $0x88] sm:$0xff] %v1168
        %1277 = vst [vmem:[#allocation2 + $0x90] sm:$0xff] %v1169
        %1278 = vst [vmem:[#allocation2 + $0x98] sm:$0xff] %v1170
        %1279 = vst [vmem:[#allocation2 + $0xa0] sm:$0xff] %v1171
        %1280 = vst [vmem:[#allocation2 + $0xa8] sm:$0xff] %v1172
        %1281 = vst [vmem:[#allocation2 + $0xb0] sm:$0xff] %v1173
        %1282 = vst [vmem:[#allocation2 + $0xb8] sm:$0xff] %v1174
        %1283 = vst [vmem:[#allocation2 + $0xc0] sm:$0xff] %v1175
        %1284 = vst [vmem:[#allocation2 + $0xc8] sm:$0xff] %v1176
        %1285 = vst [vmem:[#allocation2 + $0xd0] sm:$0xff] %v1177
        %1286 = vst [vmem:[#allocation2 + $0xd8] sm:$0xff] %v1178
        %1287 = vst [vmem:[#allocation2 + $0xe0] sm:$0xff] %v1179
        %1288 = vst [vmem:[#allocation2 + $0xe8] sm:$0xff] %v1180
        %1289 = vst [vmem:[#allocation2 + $0xf0] sm:$0xff] %v1181
        %1290 = vst [vmem:[#allocation2 + $0xf8] sm:$0xff] %v1182
        %1291 = vst [vmem:[#allocation2 + $0x100] sm:$0xff] %v1183
        %1292 = vst [vmem:[#allocation2 + $0x108] sm:$0xff] %v1184
        %1293 = vst [vmem:[#allocation2 + $0x110] sm:$0xff] %v1185
        %1294 = vst [vmem:[#allocation2 + $0x118] sm:$0xff] %v1186
        %1295 = vst [vmem:[#allocation2 + $0x120] sm:$0xff] %v1187
        %1296 = vst [vmem:[#allocation2 + $0x128] sm:$0xff] %v1188
        %1297 = vst [vmem:[#allocation2 + $0x130] sm:$0xff] %v1189
        %1298 = vst [vmem:[#allocation2 + $0x138] sm:$0xff] %v1190
        %1299 = vst [vmem:[#allocation2 + $0x140] sm:$0xff] %v1191
        %1300 = vst [vmem:[#allocation2 + $0x148] sm:$0xff] %v1192
        %1301 = vst [vmem:[#allocation2 + $0x150] sm:$0xff] %v1193
        %1302 = vst [vmem:[#allocation2 + $0x158] sm:$0xff] %v1194
        %1303 = vst [vmem:[#allocation2 + $0x160] sm:$0xff] %v1195
        %1304 = vst [vmem:[#allocation2 + $0x168] sm:$0xff] %v1196
        %1305 = vst [vmem:[#allocation2 + $0x170] sm:$0xff] %v1197
        %1306 = vst [vmem:[#allocation2 + $0x178] sm:$0xff] %v1198
        %1307 = vst [vmem:[#allocation2 + $0x180] sm:$0xff] %v1199
        %1308 = vst [vmem:[#allocation2 + $0x188] sm:$0xff] %v1200
        %1309 = vst [vmem:[#allocation2 + $0x190] sm:$0xff] %v1201
        %1310 = vst [vmem:[#allocation2 + $0x198] sm:$0xff] %v1202
        %1311 = vst [vmem:[#allocation2 + $0x1a0] sm:$0xff] %v1203
        %1312 = vst [vmem:[#allocation2 + $0x1a8] sm:$0xff] %v1204
        %1313 = vst [vmem:[#allocation2 + $0x1b0] sm:$0xff] %v1205
        %1314 = vst [vmem:[#allocation2 + $0x1b8] sm:$0xff] %v1206
        %1315 = vst [vmem:[#allocation2 + $0x1c0] sm:$0xff] %v1207
        %1316 = vst [vmem:[#allocation2 + $0x1c8] sm:$0xff] %v1208
        %1317 = vst [vmem:[#allocation2 + $0x1d0] sm:$0xff] %v1209
        %1318 = vst [vmem:[#allocation2 + $0x1d8] sm:$0xff] %v1210
        %1319 = vst [vmem:[#allocation2 + $0x1e0] sm:$0xff] %v1211
        %1320 = vst [vmem:[#allocation2 + $0x1e8] sm:$0xff] %v1212
        %1321 = vst [vmem:[#allocation2 + $0x1f0] sm:$0xff] %v1213
        %1322 = vst [vmem:[#allocation2 + $0x1f8] sm:$0xff] %v1214
        %1323 = vst [vmem:[#allocation2 + $0x200] sm:$0xff] %v1215
        %1324 = vst [vmem:[#allocation2 + $0x208] sm:$0xff] %v1216
        %1325 = vst [vmem:[#allocation2 + $0x210] sm:$0xff] %v1217
        %1326 = vst [vmem:[#allocation2 + $0x218] sm:$0xff] %v1218
        %1327 = vst [vmem:[#allocation2 + $0x220] sm:$0xff] %v1219
        %1328 = vst [vmem:[#allocation2 + $0x228] sm:$0xff] %v1220
        %1329 = vst [vmem:[#allocation2 + $0x230] sm:$0xff] %v1221
        %1330 = vst [vmem:[#allocation2 + $0x238] sm:$0xff] %v1222
        %1331 = vst [vmem:[#allocation2 + $0x240] sm:$0xff] %v1223
        %1332 = vst [vmem:[#allocation2 + $0x248] sm:$0xff] %v1224
        %1333 = vst [vmem:[#allocation2 + $0x250] sm:$0xff] %v1225
        %1334 = vst [vmem:[#allocation2 + $0x258] sm:$0xff] %v1226
        %1335 = vst [vmem:[#allocation2 + $0x260] sm:$0xff] %v1227
        %1336 = vst [vmem:[#allocation2 + $0x268] sm:$0xff] %v1228
        %1337 = vst [vmem:[#allocation2 + $0x270] sm:$0xff] %v1229
        %1338 = vst [vmem:[#allocation2 + $0x278] sm:$0xff] %v1230
        %1339 = vst [vmem:[#allocation2 + $0x280] sm:$0xff] %v1231
        %1340 = vst [vmem:[#allocation2 + $0x288] sm:$0xff] %v1232
        %1341 = vst [vmem:[#allocation2 + $0x290] sm:$0xff] %v1233
        %1342 = vst [vmem:[#allocation2 + $0x298] sm:$0xff] %v1234
        %1343 = vst [vmem:[#allocation2 + $0x2a0] sm:$0xff] %v1235
        %1344 = vst [vmem:[#allocation2 + $0x2a8] sm:$0xff] %v1236
        %1345 = vst [vmem:[#allocation2 + $0x2b0] sm:$0xff] %v1237
        %1346 = vst [vmem:[#allocation2 + $0x2b8] sm:$0xff] %v1238
        %1347 = vst [vmem:[#allocation2 + $0x2c0] sm:$0xff] %v1239
        %1348 = vst [vmem:[#allocation2 + $0x2c8] sm:$0xff] %v1240
        %1349 = vst [vmem:[#allocation2 + $0x2d0] sm:$0xff] %v1241
        %1350 = vst [vmem:[#allocation2 + $0x2d8] sm:$0xff] %v1242
        %1351 = vst [vmem:[#allocation2 + $0x2e0] sm:$0xff] %v1243
        %1352 = vst [vmem:[#allocation2 + $0x2e8] sm:$0xff] %v1244
        %1353 = vst [vmem:[#allocation2 + $0x2f0] sm:$0xff] %v1245
        %1354 = vst [vmem:[#allocation2 + $0x2f8] sm:$0xff] %v1246
        %1355 = vst [vmem:[#allocation2 + $0x300] sm:$0xff] %v1247
        %1356 = vst [vmem:[#allocation2 + $0x308] sm:$0xff] %v1248
        %1357 = vst [vmem:[#allocation2 + $0x310] sm:$0xff] %v1249
        %1358 = vst [vmem:[#allocation2 + $0x318] sm:$0xff] %v1250
        %1359 = vst [vmem:[#allocation2 + $0x320] sm:$0xff] %v1251
        %1360 = vst [vmem:[#allocation2 + $0x328] sm:$0xff] %v1252
        %1361 = vst [vmem:[#allocation2 + $0x330] sm:$0xff] %v1253
        %1362 = vst [vmem:[#allocation2 + $0x338] sm:$0xff] %v1254
        %1363 = vst [vmem:[#allocation2 + $0x340] sm:$0xff] %v1255
        %1364 = vst [vmem:[#allocation2 + $0x348] sm:$0xff] %v1256
        %1365 = vst [vmem:[#allocation2 + $0x350] sm:$0xff] %v1257
        %1366 = vst [vmem:[#allocation2 + $0x358] sm:$0xff] %v1258
        // Predicated region
        $region53: #{tpu_custom_call.1} parent=35 // pred_check
          %p1367 = pneg %p316
        $region54: #{tpu_custom_call.1} parent=35 // pred_check_branch
          %1369 = sbr.rel (%p1367) target = $region56
        $region55: #{tpu_custom_call.1} parent=35 // pred_region
          %v1370 = vld [vmem:[#allocation2] sm:$0xff]
          %v1371 = vld [vmem:[#allocation2 + $0x8] sm:$0xff]
          %v1372 = vld [vmem:[#allocation2 + $0x10] sm:$0xff]
          %v1373 = vld [vmem:[#allocation2 + $0x18] sm:$0xff]
          %v1374 = vld [vmem:[#allocation2 + $0x20] sm:$0xff]
          %v1375 = vld [vmem:[#allocation2 + $0x28] sm:$0xff]
          %v1376 = vld [vmem:[#allocation2 + $0x30] sm:$0xff]
          %v1377 = vld [vmem:[#allocation2 + $0x38] sm:$0xff]
          %v1378 = vld [vmem:[#allocation2 + $0x40] sm:$0xff]
          %v1379 = vld [vmem:[#allocation2 + $0x48] sm:$0xff]
          %v1380 = vld [vmem:[#allocation2 + $0x50] sm:$0xff]
          %v1381 = vld [vmem:[#allocation2 + $0x58] sm:$0xff]
          %v1382 = vld [vmem:[#allocation2 + $0x60] sm:$0xff]
          %v1383 = vld [vmem:[#allocation2 + $0x68] sm:$0xff]
          %v1384 = vld [vmem:[#allocation2 + $0x70] sm:$0xff]
          %v1385 = vld [vmem:[#allocation2 + $0x78] sm:$0xff]
          %v1386 = vld [vmem:[#allocation2 + $0x80] sm:$0xff]
          %v1387 = vld [vmem:[#allocation2 + $0x88] sm:$0xff]
          %v1388 = vld [vmem:[#allocation2 + $0x90] sm:$0xff]
          %v1389 = vld [vmem:[#allocation2 + $0x98] sm:$0xff]
          %v1390 = vld [vmem:[#allocation2 + $0xa0] sm:$0xff]
          %v1391 = vld [vmem:[#allocation2 + $0xa8] sm:$0xff]
          %v1392 = vld [vmem:[#allocation2 + $0xb0] sm:$0xff]
          %v1393 = vld [vmem:[#allocation2 + $0xb8] sm:$0xff]
          %v1394 = vld [vmem:[#allocation2 + $0xc0] sm:$0xff]
          %v1395 = vld [vmem:[#allocation2 + $0xc8] sm:$0xff]
          %v1396 = vld [vmem:[#allocation2 + $0xd0] sm:$0xff]
          %v1397 = vld [vmem:[#allocation2 + $0xd8] sm:$0xff]
          %v1398 = vld [vmem:[#allocation2 + $0xe0] sm:$0xff]
          %v1399 = vld [vmem:[#allocation2 + $0xe8] sm:$0xff]
          %v1400 = vld [vmem:[#allocation2 + $0xf0] sm:$0xff]
          %v1401 = vld [vmem:[#allocation2 + $0xf8] sm:$0xff]
          %v1402 = vld [vmem:[#allocation2 + $0x100] sm:$0xff]
          %v1403 = vld [vmem:[#allocation2 + $0x108] sm:$0xff]
          %v1404 = vld [vmem:[#allocation2 + $0x110] sm:$0xff]
          %v1405 = vld [vmem:[#allocation2 + $0x118] sm:$0xff]
          %v1406 = vld [vmem:[#allocation2 + $0x120] sm:$0xff]
          %v1407 = vld [vmem:[#allocation2 + $0x128] sm:$0xff]
          %v1408 = vld [vmem:[#allocation2 + $0x130] sm:$0xff]
          %v1409 = vld [vmem:[#allocation2 + $0x138] sm:$0xff]
          %v1410 = vld [vmem:[#allocation2 + $0x140] sm:$0xff]
          %v1411 = vld [vmem:[#allocation2 + $0x148] sm:$0xff]
          %v1412 = vld [vmem:[#allocation2 + $0x150] sm:$0xff]
          %v1413 = vld [vmem:[#allocation2 + $0x158] sm:$0xff]
          %v1414 = vld [vmem:[#allocation2 + $0x160] sm:$0xff]
          %v1415 = vld [vmem:[#allocation2 + $0x168] sm:$0xff]
          %v1416 = vld [vmem:[#allocation2 + $0x170] sm:$0xff]
          %v1417 = vld [vmem:[#allocation2 + $0x178] sm:$0xff]
          %v1418 = vld [vmem:[#allocation2 + $0x180] sm:$0xff]
          %v1419 = vld [vmem:[#allocation2 + $0x188] sm:$0xff]
          %v1420 = vld [vmem:[#allocation2 + $0x190] sm:$0xff]
          %v1421 = vld [vmem:[#allocation2 + $0x198] sm:$0xff]
          %v1422 = vld [vmem:[#allocation2 + $0x1a0] sm:$0xff]
          %v1423 = vld [vmem:[#allocation2 + $0x1a8] sm:$0xff]
          %v1424 = vld [vmem:[#allocation2 + $0x1b0] sm:$0xff]
          %v1425 = vld [vmem:[#allocation2 + $0x1b8] sm:$0xff]
          %v1426 = vld [vmem:[#allocation2 + $0x1c0] sm:$0xff]
          %v1427 = vld [vmem:[#allocation2 + $0x1c8] sm:$0xff]
          %v1428 = vld [vmem:[#allocation2 + $0x1d0] sm:$0xff]
          %v1429 = vld [vmem:[#allocation2 + $0x1d8] sm:$0xff]
          %v1430 = vld [vmem:[#allocation2 + $0x1e0] sm:$0xff]
          %v1431 = vld [vmem:[#allocation2 + $0x1e8] sm:$0xff]
          %v1432 = vld [vmem:[#allocation2 + $0x1f0] sm:$0xff]
          %v1433 = vld [vmem:[#allocation2 + $0x1f8] sm:$0xff]
          %v1434 = vld [vmem:[#allocation2 + $0x200] sm:$0xff]
          %v1435 = vld [vmem:[#allocation2 + $0x208] sm:$0xff]
          %v1436 = vld [vmem:[#allocation2 + $0x210] sm:$0xff]
          %v1437 = vld [vmem:[#allocation2 + $0x218] sm:$0xff]
          %v1438 = vld [vmem:[#allocation2 + $0x220] sm:$0xff]
          %v1439 = vld [vmem:[#allocation2 + $0x228] sm:$0xff]
          %v1440 = vld [vmem:[#allocation2 + $0x230] sm:$0xff]
          %v1441 = vld [vmem:[#allocation2 + $0x238] sm:$0xff]
          %v1442 = vld [vmem:[#allocation2 + $0x240] sm:$0xff]
          %v1443 = vld [vmem:[#allocation2 + $0x248] sm:$0xff]
          %v1444 = vld [vmem:[#allocation2 + $0x250] sm:$0xff]
          %v1445 = vld [vmem:[#allocation2 + $0x258] sm:$0xff]
          %v1446 = vld [vmem:[#allocation2 + $0x260] sm:$0xff]
          %v1447 = vld [vmem:[#allocation2 + $0x268] sm:$0xff]
          %v1448 = vld [vmem:[#allocation2 + $0x270] sm:$0xff]
          %v1449 = vld [vmem:[#allocation2 + $0x278] sm:$0xff]
          %v1450 = vld [vmem:[#allocation2 + $0x280] sm:$0xff]
          %v1451 = vld [vmem:[#allocation2 + $0x288] sm:$0xff]
          %v1452 = vld [vmem:[#allocation2 + $0x290] sm:$0xff]
          %v1453 = vld [vmem:[#allocation2 + $0x298] sm:$0xff]
          %v1454 = vld [vmem:[#allocation2 + $0x2a0] sm:$0xff]
          %v1455 = vld [vmem:[#allocation2 + $0x2a8] sm:$0xff]
          %v1456 = vld [vmem:[#allocation2 + $0x2b0] sm:$0xff]
          %v1457 = vld [vmem:[#allocation2 + $0x2b8] sm:$0xff]
          %v1458 = vld [vmem:[#allocation2 + $0x2c0] sm:$0xff]
          %v1459 = vld [vmem:[#allocation2 + $0x2c8] sm:$0xff]
          %v1460 = vld [vmem:[#allocation2 + $0x2d0] sm:$0xff]
          %v1461 = vld [vmem:[#allocation2 + $0x2d8] sm:$0xff]
          %v1462 = vld [vmem:[#allocation2 + $0x2e0] sm:$0xff]
          %v1463 = vld [vmem:[#allocation2 + $0x2e8] sm:$0xff]
          %v1464 = vld [vmem:[#allocation2 + $0x2f0] sm:$0xff]
          %v1465 = vld [vmem:[#allocation2 + $0x2f8] sm:$0xff]
          %v1466 = vld [vmem:[#allocation2 + $0x300] sm:$0xff]
          %v1467 = vld [vmem:[#allocation2 + $0x308] sm:$0xff]
          %v1468 = vld [vmem:[#allocation2 + $0x310] sm:$0xff]
          %v1469 = vld [vmem:[#allocation2 + $0x318] sm:$0xff]
          %v1470 = vld [vmem:[#allocation2 + $0x320] sm:$0xff]
          %v1471 = vld [vmem:[#allocation2 + $0x328] sm:$0xff]
          %v1472 = vld [vmem:[#allocation2 + $0x330] sm:$0xff]
          %v1473 = vld [vmem:[#allocation2 + $0x338] sm:$0xff]
          %v1474 = vld [vmem:[#allocation2 + $0x340] sm:$0xff]
          %v1475 = vld [vmem:[#allocation2 + $0x348] sm:$0xff]
          %v1476 = vld [vmem:[#allocation2 + $0x350] sm:$0xff]
          %v1477 = vld [vmem:[#allocation2 + $0x358] sm:$0xff]
          %v1478 = vld [vmem:[%s311] sm:$0x3]
          %v1480 = vlaneseq
          %v1481 = vshrl.u32 %v1480, 7
          %v1482 = vsub.s32 0, %v1481
          %v1483 = vrot.slane %v1478, %v1482
          %v1484 = vlaneseq
          %v1485 = vshrl.u32 %v1484, 7
          %v1486 = vsub.s32 1, %v1485
          %v1487 = vrot.slane %v1478, %v1486
          %v1490 = vadd.f32 %v1370, %v1483
          %v1491 = vadd.f32 %v1371, %v1487
          %v1492 = vadd.f32 %v1372, %v1483
          %v1493 = vadd.f32 %v1373, %v1487
          %v1494 = vadd.f32 %v1374, %v1483
          %v1495 = vadd.f32 %v1375, %v1487
          %v1496 = vadd.f32 %v1376, %v1483
          %v1497 = vadd.f32 %v1377, %v1487
          %v1498 = vadd.f32 %v1378, %v1483
          %v1499 = vadd.f32 %v1379, %v1487
          %v1500 = vadd.f32 %v1380, %v1483
          %v1501 = vadd.f32 %v1381, %v1487
          %v1502 = vadd.f32 %v1382, %v1483
          %v1503 = vadd.f32 %v1383, %v1487
          %v1504 = vadd.f32 %v1384, %v1483
          %v1505 = vadd.f32 %v1385, %v1487
          %v1506 = vadd.f32 %v1386, %v1483
          %v1507 = vadd.f32 %v1387, %v1487
          %v1508 = vadd.f32 %v1388, %v1483
          %v1509 = vadd.f32 %v1389, %v1487
          %v1510 = vadd.f32 %v1390, %v1483
          %v1511 = vadd.f32 %v1391, %v1487
          %v1512 = vadd.f32 %v1392, %v1483
          %v1513 = vadd.f32 %v1393, %v1487
          %v1514 = vadd.f32 %v1394, %v1483
          %v1515 = vadd.f32 %v1395, %v1487
          %v1516 = vadd.f32 %v1396, %v1483
          %v1517 = vadd.f32 %v1397, %v1487
          %v1518 = vadd.f32 %v1398, %v1483
          %v1519 = vadd.f32 %v1399, %v1487
          %v1520 = vadd.f32 %v1400, %v1483
          %v1521 = vadd.f32 %v1401, %v1487
          %v1522 = vadd.f32 %v1402, %v1483
          %v1523 = vadd.f32 %v1403, %v1487
          %v1524 = vadd.f32 %v1404, %v1483
          %v1525 = vadd.f32 %v1405, %v1487
          %v1526 = vadd.f32 %v1406, %v1483
          %v1527 = vadd.f32 %v1407, %v1487
          %v1528 = vadd.f32 %v1408, %v1483
          %v1529 = vadd.f32 %v1409, %v1487
          %v1530 = vadd.f32 %v1410, %v1483
          %v1531 = vadd.f32 %v1411, %v1487
          %v1532 = vadd.f32 %v1412, %v1483
          %v1533 = vadd.f32 %v1413, %v1487
          %v1534 = vadd.f32 %v1414, %v1483
          %v1535 = vadd.f32 %v1415, %v1487
          %v1536 = vadd.f32 %v1416, %v1483
          %v1537 = vadd.f32 %v1417, %v1487
          %v1538 = vadd.f32 %v1418, %v1483
          %v1539 = vadd.f32 %v1419, %v1487
          %v1540 = vadd.f32 %v1420, %v1483
          %v1541 = vadd.f32 %v1421, %v1487
          %v1542 = vadd.f32 %v1422, %v1483
          %v1543 = vadd.f32 %v1423, %v1487
          %v1544 = vadd.f32 %v1424, %v1483
          %v1545 = vadd.f32 %v1425, %v1487
          %v1546 = vadd.f32 %v1426, %v1483
          %v1547 = vadd.f32 %v1427, %v1487
          %v1548 = vadd.f32 %v1428, %v1483
          %v1549 = vadd.f32 %v1429, %v1487
          %v1550 = vadd.f32 %v1430, %v1483
          %v1551 = vadd.f32 %v1431, %v1487
          %v1552 = vadd.f32 %v1432, %v1483
          %v1553 = vadd.f32 %v1433, %v1487
          %v1554 = vadd.f32 %v1434, %v1483
          %v1555 = vadd.f32 %v1435, %v1487
          %v1556 = vadd.f32 %v1436, %v1483
          %v1557 = vadd.f32 %v1437, %v1487
          %v1558 = vadd.f32 %v1438, %v1483
          %v1559 = vadd.f32 %v1439, %v1487
          %v1560 = vadd.f32 %v1440, %v1483
          %v1561 = vadd.f32 %v1441, %v1487
          %v1562 = vadd.f32 %v1442, %v1483
          %v1563 = vadd.f32 %v1443, %v1487
          %v1564 = vadd.f32 %v1444, %v1483
          %v1565 = vadd.f32 %v1445, %v1487
          %v1566 = vadd.f32 %v1446, %v1483
          %v1567 = vadd.f32 %v1447, %v1487
          %v1568 = vadd.f32 %v1448, %v1483
          %v1569 = vadd.f32 %v1449, %v1487
          %v1570 = vadd.f32 %v1450, %v1483
          %v1571 = vadd.f32 %v1451, %v1487
          %v1572 = vadd.f32 %v1452, %v1483
          %v1573 = vadd.f32 %v1453, %v1487
          %v1574 = vadd.f32 %v1454, %v1483
          %v1575 = vadd.f32 %v1455, %v1487
          %v1576 = vadd.f32 %v1456, %v1483
          %v1577 = vadd.f32 %v1457, %v1487
          %v1578 = vadd.f32 %v1458, %v1483
          %v1579 = vadd.f32 %v1459, %v1487
          %v1580 = vadd.f32 %v1460, %v1483
          %v1581 = vadd.f32 %v1461, %v1487
          %v1582 = vadd.f32 %v1462, %v1483
          %v1583 = vadd.f32 %v1463, %v1487
          %v1584 = vadd.f32 %v1464, %v1483
          %v1585 = vadd.f32 %v1465, %v1487
          %v1586 = vadd.f32 %v1466, %v1483
          %v1587 = vadd.f32 %v1467, %v1487
          %v1588 = vadd.f32 %v1468, %v1483
          %v1589 = vadd.f32 %v1469, %v1487
          %v1590 = vadd.f32 %v1470, %v1483
          %v1591 = vadd.f32 %v1471, %v1487
          %v1592 = vadd.f32 %v1472, %v1483
          %v1593 = vadd.f32 %v1473, %v1487
          %v1594 = vadd.f32 %v1474, %v1483
          %v1595 = vadd.f32 %v1475, %v1487
          %v1596 = vadd.f32 %v1476, %v1483
          %v1597 = vadd.f32 %v1477, %v1487
          %v1598 = vld [vmem:[%s272] sm:$0xff]
          %v1599 = vld [vmem:[%s272 + $0x8] sm:$0xff]
          %v1600 = vld [vmem:[%s272 + $0x10] sm:$0xff]
          %v1601 = vld [vmem:[%s272 + $0x18] sm:$0xff]
          %v1602 = vld [vmem:[%s272 + $0x20] sm:$0xff]
          %v1603 = vld [vmem:[%s272 + $0x28] sm:$0xff]
          %v1604 = vld [vmem:[%s272 + $0x30] sm:$0xff]
          %v1605 = vld [vmem:[%s272 + $0x38] sm:$0xff]
          %v1606 = vld [vmem:[%s272 + $0x40] sm:$0xff]
          %v1607 = vld [vmem:[%s272 + $0x48] sm:$0xff]
          %v1608 = vld [vmem:[%s272 + $0x50] sm:$0xff]
          %v1609 = vld [vmem:[%s272 + $0x58] sm:$0xff]
          %v1610 = vld [vmem:[%s272 + $0x60] sm:$0xff]
          %v1611 = vld [vmem:[%s272 + $0x68] sm:$0xff]
          %v1612 = vld [vmem:[%s272 + $0x70] sm:$0xff]
          %v1613 = vld [vmem:[%s272 + $0x78] sm:$0xff]
          %v1614 = vld [vmem:[%s272 + $0x80] sm:$0xff]
          %v1615 = vld [vmem:[%s272 + $0x88] sm:$0xff]
          %v1616 = vld [vmem:[%s272 + $0x90] sm:$0xff]
          %v1617 = vld [vmem:[%s272 + $0x98] sm:$0xff]
          %v1618 = vld [vmem:[%s272 + $0xa0] sm:$0xff]
          %v1619 = vld [vmem:[%s272 + $0xa8] sm:$0xff]
          %v1620 = vld [vmem:[%s272 + $0xb0] sm:$0xff]
          %v1621 = vld [vmem:[%s272 + $0xb8] sm:$0xff]
          %v1622 = vld [vmem:[%s272 + $0xc0] sm:$0xff]
          %v1623 = vld [vmem:[%s272 + $0xc8] sm:$0xff]
          %v1624 = vld [vmem:[%s272 + $0xd0] sm:$0xff]
          %v1625 = vld [vmem:[%s272 + $0xd8] sm:$0xff]
          %v1626 = vld [vmem:[%s272 + $0xe0] sm:$0xff]
          %v1627 = vld [vmem:[%s272 + $0xe8] sm:$0xff]
          %v1628 = vld [vmem:[%s272 + $0xf0] sm:$0xff]
          %v1629 = vld [vmem:[%s272 + $0xf8] sm:$0xff]
          %v1630 = vld [vmem:[%s272 + $0x100] sm:$0xff]
          %v1631 = vld [vmem:[%s272 + $0x108] sm:$0xff]
          %v1632 = vld [vmem:[%s272 + $0x110] sm:$0xff]
          %v1633 = vld [vmem:[%s272 + $0x118] sm:$0xff]
          %v1634 = vld [vmem:[%s272 + $0x120] sm:$0xff]
          %v1635 = vld [vmem:[%s272 + $0x128] sm:$0xff]
          %v1636 = vld [vmem:[%s272 + $0x130] sm:$0xff]
          %v1637 = vld [vmem:[%s272 + $0x138] sm:$0xff]
          %v1638 = vld [vmem:[%s272 + $0x140] sm:$0xff]
          %v1639 = vld [vmem:[%s272 + $0x148] sm:$0xff]
          %v1640 = vld [vmem:[%s272 + $0x150] sm:$0xff]
          %v1641 = vld [vmem:[%s272 + $0x158] sm:$0xff]
          %v1642 = vld [vmem:[%s272 + $0x160] sm:$0xff]
          %v1643 = vld [vmem:[%s272 + $0x168] sm:$0xff]
          %v1644 = vld [vmem:[%s272 + $0x170] sm:$0xff]
          %v1645 = vld [vmem:[%s272 + $0x178] sm:$0xff]
          %v1646 = vld [vmem:[%s272 + $0x180] sm:$0xff]
          %v1647 = vld [vmem:[%s272 + $0x188] sm:$0xff]
          %v1648 = vld [vmem:[%s272 + $0x190] sm:$0xff]
          %v1649 = vld [vmem:[%s272 + $0x198] sm:$0xff]
          %v1650 = vld [vmem:[%s272 + $0x1a0] sm:$0xff]
          %v1651 = vld [vmem:[%s272 + $0x1a8] sm:$0xff]
          %v1652 = vld [vmem:[%s272 + $0x1b0] sm:$0xff]
          %v1653 = vld [vmem:[%s272 + $0x1b8] sm:$0xff]
          %v1654 = vld [vmem:[%s272 + $0x1c0] sm:$0xff]
          %v1655 = vld [vmem:[%s272 + $0x1c8] sm:$0xff]
          %v1656 = vld [vmem:[%s272 + $0x1d0] sm:$0xff]
          %v1657 = vld [vmem:[%s272 + $0x1d8] sm:$0xff]
          %v1658 = vld [vmem:[%s272 + $0x1e0] sm:$0xff]
          %v1659 = vld [vmem:[%s272 + $0x1e8] sm:$0xff]
          %v1660 = vld [vmem:[%s272 + $0x1f0] sm:$0xff]
          %v1661 = vld [vmem:[%s272 + $0x1f8] sm:$0xff]
          %v1662 = vld [vmem:[%s272 + $0x200] sm:$0xff]
          %v1663 = vld [vmem:[%s272 + $0x208] sm:$0xff]
          %v1664 = vld [vmem:[%s272 + $0x210] sm:$0xff]
          %v1665 = vld [vmem:[%s272 + $0x218] sm:$0xff]
          %v1666 = vld [vmem:[%s272 + $0x220] sm:$0xff]
          %v1667 = vld [vmem:[%s272 + $0x228] sm:$0xff]
          %v1668 = vld [vmem:[%s272 + $0x230] sm:$0xff]
          %v1669 = vld [vmem:[%s272 + $0x238] sm:$0xff]
          %v1670 = vld [vmem:[%s272 + $0x240] sm:$0xff]
          %v1671 = vld [vmem:[%s272 + $0x248] sm:$0xff]
          %v1672 = vld [vmem:[%s272 + $0x250] sm:$0xff]
          %v1673 = vld [vmem:[%s272 + $0x258] sm:$0xff]
          %v1674 = vld [vmem:[%s272 + $0x260] sm:$0xff]
          %v1675 = vld [vmem:[%s272 + $0x268] sm:$0xff]
          %v1676 = vld [vmem:[%s272 + $0x270] sm:$0xff]
          %v1677 = vld [vmem:[%s272 + $0x278] sm:$0xff]
          %v1678 = vld [vmem:[%s272 + $0x280] sm:$0xff]
          %v1679 = vld [vmem:[%s272 + $0x288] sm:$0xff]
          %v1680 = vld [vmem:[%s272 + $0x290] sm:$0xff]
          %v1681 = vld [vmem:[%s272 + $0x298] sm:$0xff]
          %v1682 = vld [vmem:[%s272 + $0x2a0] sm:$0xff]
          %v1683 = vld [vmem:[%s272 + $0x2a8] sm:$0xff]
          %v1684 = vld [vmem:[%s272 + $0x2b0] sm:$0xff]
          %v1685 = vld [vmem:[%s272 + $0x2b8] sm:$0xff]
          %v1686 = vld [vmem:[%s272 + $0x2c0] sm:$0xff]
          %v1687 = vld [vmem:[%s272 + $0x2c8] sm:$0xff]
          %v1688 = vld [vmem:[%s272 + $0x2d0] sm:$0xff]
          %v1689 = vld [vmem:[%s272 + $0x2d8] sm:$0xff]
          %v1690 = vld [vmem:[%s272 + $0x2e0] sm:$0xff]
          %v1691 = vld [vmem:[%s272 + $0x2e8] sm:$0xff]
          %v1692 = vld [vmem:[%s272 + $0x2f0] sm:$0xff]
          %v1693 = vld [vmem:[%s272 + $0x2f8] sm:$0xff]
          %v1694 = vld [vmem:[%s272 + $0x300] sm:$0xff]
          %v1695 = vld [vmem:[%s272 + $0x308] sm:$0xff]
          %v1696 = vld [vmem:[%s272 + $0x310] sm:$0xff]
          %v1697 = vld [vmem:[%s272 + $0x318] sm:$0xff]
          %v1698 = vld [vmem:[%s272 + $0x320] sm:$0xff]
          %v1699 = vld [vmem:[%s272 + $0x328] sm:$0xff]
          %v1700 = vld [vmem:[%s272 + $0x330] sm:$0xff]
          %v1701 = vld [vmem:[%s272 + $0x338] sm:$0xff]
          %v1702 = vld [vmem:[%s272 + $0x340] sm:$0xff]
          %v1703 = vld [vmem:[%s272 + $0x348] sm:$0xff]
          %v1704 = vld [vmem:[%s272 + $0x350] sm:$0xff]
          %v1705 = vld [vmem:[%s272 + $0x358] sm:$0xff]
          %v1706 = vadd.f32 %v1490, %v1598
          %v1707 = vadd.f32 %v1491, %v1599
          %v1708 = vadd.f32 %v1492, %v1600
          %v1709 = vadd.f32 %v1493, %v1601
          %v1710 = vadd.f32 %v1494, %v1602
          %v1711 = vadd.f32 %v1495, %v1603
          %v1712 = vadd.f32 %v1496, %v1604
          %v1713 = vadd.f32 %v1497, %v1605
          %v1714 = vadd.f32 %v1498, %v1606
          %v1715 = vadd.f32 %v1499, %v1607
          %v1716 = vadd.f32 %v1500, %v1608
          %v1717 = vadd.f32 %v1501, %v1609
          %v1718 = vadd.f32 %v1502, %v1610
          %v1719 = vadd.f32 %v1503, %v1611
          %v1720 = vadd.f32 %v1504, %v1612
          %v1721 = vadd.f32 %v1505, %v1613
          %v1722 = vadd.f32 %v1506, %v1614
          %v1723 = vadd.f32 %v1507, %v1615
          %v1724 = vadd.f32 %v1508, %v1616
          %v1725 = vadd.f32 %v1509, %v1617
          %v1726 = vadd.f32 %v1510, %v1618
          %v1727 = vadd.f32 %v1511, %v1619
          %v1728 = vadd.f32 %v1512, %v1620
          %v1729 = vadd.f32 %v1513, %v1621
          %v1730 = vadd.f32 %v1514, %v1622
          %v1731 = vadd.f32 %v1515, %v1623
          %v1732 = vadd.f32 %v1516, %v1624
          %v1733 = vadd.f32 %v1517, %v1625
          %v1734 = vadd.f32 %v1518, %v1626
          %v1735 = vadd.f32 %v1519, %v1627
          %v1736 = vadd.f32 %v1520, %v1628
          %v1737 = vadd.f32 %v1521, %v1629
          %v1738 = vadd.f32 %v1522, %v1630
          %v1739 = vadd.f32 %v1523, %v1631
          %v1740 = vadd.f32 %v1524, %v1632
          %v1741 = vadd.f32 %v1525, %v1633
          %v1742 = vadd.f32 %v1526, %v1634
          %v1743 = vadd.f32 %v1527, %v1635
          %v1744 = vadd.f32 %v1528, %v1636
          %v1745 = vadd.f32 %v1529, %v1637
          %v1746 = vadd.f32 %v1530, %v1638
          %v1747 = vadd.f32 %v1531, %v1639
          %v1748 = vadd.f32 %v1532, %v1640
          %v1749 = vadd.f32 %v1533, %v1641
          %v1750 = vadd.f32 %v1534, %v1642
          %v1751 = vadd.f32 %v1535, %v1643
          %v1752 = vadd.f32 %v1536, %v1644
          %v1753 = vadd.f32 %v1537, %v1645
          %v1754 = vadd.f32 %v1538, %v1646
          %v1755 = vadd.f32 %v1539, %v1647
          %v1756 = vadd.f32 %v1540, %v1648
          %v1757 = vadd.f32 %v1541, %v1649
          %v1758 = vadd.f32 %v1542, %v1650
          %v1759 = vadd.f32 %v1543, %v1651
          %v1760 = vadd.f32 %v1544, %v1652
          %v1761 = vadd.f32 %v1545, %v1653
          %v1762 = vadd.f32 %v1546, %v1654
          %v1763 = vadd.f32 %v1547, %v1655
          %v1764 = vadd.f32 %v1548, %v1656
          %v1765 = vadd.f32 %v1549, %v1657
          %v1766 = vadd.f32 %v1550, %v1658
          %v1767 = vadd.f32 %v1551, %v1659
          %v1768 = vadd.f32 %v1552, %v1660
          %v1769 = vadd.f32 %v1553, %v1661
          %v1770 = vadd.f32 %v1554, %v1662
          %v1771 = vadd.f32 %v1555, %v1663
          %v1772 = vadd.f32 %v1556, %v1664
          %v1773 = vadd.f32 %v1557, %v1665
          %v1774 = vadd.f32 %v1558, %v1666
          %v1775 = vadd.f32 %v1559, %v1667
          %v1776 = vadd.f32 %v1560, %v1668
          %v1777 = vadd.f32 %v1561, %v1669
          %v1778 = vadd.f32 %v1562, %v1670
          %v1779 = vadd.f32 %v1563, %v1671
          %v1780 = vadd.f32 %v1564, %v1672
          %v1781 = vadd.f32 %v1565, %v1673
          %v1782 = vadd.f32 %v1566, %v1674
          %v1783 = vadd.f32 %v1567, %v1675
          %v1784 = vadd.f32 %v1568, %v1676
          %v1785 = vadd.f32 %v1569, %v1677
          %v1786 = vadd.f32 %v1570, %v1678
          %v1787 = vadd.f32 %v1571, %v1679
          %v1788 = vadd.f32 %v1572, %v1680
          %v1789 = vadd.f32 %v1573, %v1681
          %v1790 = vadd.f32 %v1574, %v1682
          %v1791 = vadd.f32 %v1575, %v1683
          %v1792 = vadd.f32 %v1576, %v1684
          %v1793 = vadd.f32 %v1577, %v1685
          %v1794 = vadd.f32 %v1578, %v1686
          %v1795 = vadd.f32 %v1579, %v1687
          %v1796 = vadd.f32 %v1580, %v1688
          %v1797 = vadd.f32 %v1581, %v1689
          %v1798 = vadd.f32 %v1582, %v1690
          %v1799 = vadd.f32 %v1583, %v1691
          %v1800 = vadd.f32 %v1584, %v1692
          %v1801 = vadd.f32 %v1585, %v1693
          %v1802 = vadd.f32 %v1586, %v1694
          %v1803 = vadd.f32 %v1587, %v1695
          %v1804 = vadd.f32 %v1588, %v1696
          %v1805 = vadd.f32 %v1589, %v1697
          %v1806 = vadd.f32 %v1590, %v1698
          %v1807 = vadd.f32 %v1591, %v1699
          %v1808 = vadd.f32 %v1592, %v1700
          %v1809 = vadd.f32 %v1593, %v1701
          %v1810 = vadd.f32 %v1594, %v1702
          %v1811 = vadd.f32 %v1595, %v1703
          %v1812 = vadd.f32 %v1596, %v1704
          %v1813 = vadd.f32 %v1597, %v1705
          %1814 = vst [vmem:[%s305] sm:$0xff] %v1706
          %1815 = vst [vmem:[%s305 + $0x8] sm:$0xff] %v1707
          %1816 = vst [vmem:[%s305 + $0x10] sm:$0xff] %v1708
          %1817 = vst [vmem:[%s305 + $0x18] sm:$0xff] %v1709
          %1818 = vst [vmem:[%s305 + $0x20] sm:$0xff] %v1710
          %1819 = vst [vmem:[%s305 + $0x28] sm:$0xff] %v1711
          %1820 = vst [vmem:[%s305 + $0x30] sm:$0xff] %v1712
          %1821 = vst [vmem:[%s305 + $0x38] sm:$0xff] %v1713
          %1822 = vst [vmem:[%s305 + $0x40] sm:$0xff] %v1714
          %1823 = vst [vmem:[%s305 + $0x48] sm:$0xff] %v1715
          %1824 = vst [vmem:[%s305 + $0x50] sm:$0xff] %v1716
          %1825 = vst [vmem:[%s305 + $0x58] sm:$0xff] %v1717
          %1826 = vst [vmem:[%s305 + $0x60] sm:$0xff] %v1718
          %1827 = vst [vmem:[%s305 + $0x68] sm:$0xff] %v1719
          %1828 = vst [vmem:[%s305 + $0x70] sm:$0xff] %v1720
          %1829 = vst [vmem:[%s305 + $0x78] sm:$0xff] %v1721
          %1830 = vst [vmem:[%s305 + $0x80] sm:$0xff] %v1722
          %1831 = vst [vmem:[%s305 + $0x88] sm:$0xff] %v1723
          %1832 = vst [vmem:[%s305 + $0x90] sm:$0xff] %v1724
          %1833 = vst [vmem:[%s305 + $0x98] sm:$0xff] %v1725
          %1834 = vst [vmem:[%s305 + $0xa0] sm:$0xff] %v1726
          %1835 = vst [vmem:[%s305 + $0xa8] sm:$0xff] %v1727
          %1836 = vst [vmem:[%s305 + $0xb0] sm:$0xff] %v1728
          %1837 = vst [vmem:[%s305 + $0xb8] sm:$0xff] %v1729
          %1838 = vst [vmem:[%s305 + $0xc0] sm:$0xff] %v1730
          %1839 = vst [vmem:[%s305 + $0xc8] sm:$0xff] %v1731
          %1840 = vst [vmem:[%s305 + $0xd0] sm:$0xff] %v1732
          %1841 = vst [vmem:[%s305 + $0xd8] sm:$0xff] %v1733
          %1842 = vst [vmem:[%s305 + $0xe0] sm:$0xff] %v1734
          %1843 = vst [vmem:[%s305 + $0xe8] sm:$0xff] %v1735
          %1844 = vst [vmem:[%s305 + $0xf0] sm:$0xff] %v1736
          %1845 = vst [vmem:[%s305 + $0xf8] sm:$0xff] %v1737
          %1846 = vst [vmem:[%s305 + $0x100] sm:$0xff] %v1738
          %1847 = vst [vmem:[%s305 + $0x108] sm:$0xff] %v1739
          %1848 = vst [vmem:[%s305 + $0x110] sm:$0xff] %v1740
          %1849 = vst [vmem:[%s305 + $0x118] sm:$0xff] %v1741
          %1850 = vst [vmem:[%s305 + $0x120] sm:$0xff] %v1742
          %1851 = vst [vmem:[%s305 + $0x128] sm:$0xff] %v1743
          %1852 = vst [vmem:[%s305 + $0x130] sm:$0xff] %v1744
          %1853 = vst [vmem:[%s305 + $0x138] sm:$0xff] %v1745
          %1854 = vst [vmem:[%s305 + $0x140] sm:$0xff] %v1746
          %1855 = vst [vmem:[%s305 + $0x148] sm:$0xff] %v1747
          %1856 = vst [vmem:[%s305 + $0x150] sm:$0xff] %v1748
          %1857 = vst [vmem:[%s305 + $0x158] sm:$0xff] %v1749
          %1858 = vst [vmem:[%s305 + $0x160] sm:$0xff] %v1750
          %1859 = vst [vmem:[%s305 + $0x168] sm:$0xff] %v1751
          %1860 = vst [vmem:[%s305 + $0x170] sm:$0xff] %v1752
          %1861 = vst [vmem:[%s305 + $0x178] sm:$0xff] %v1753
          %1862 = vst [vmem:[%s305 + $0x180] sm:$0xff] %v1754
          %1863 = vst [vmem:[%s305 + $0x188] sm:$0xff] %v1755
          %1864 = vst [vmem:[%s305 + $0x190] sm:$0xff] %v1756
          %1865 = vst [vmem:[%s305 + $0x198] sm:$0xff] %v1757
          %1866 = vst [vmem:[%s305 + $0x1a0] sm:$0xff] %v1758
          %1867 = vst [vmem:[%s305 + $0x1a8] sm:$0xff] %v1759
          %1868 = vst [vmem:[%s305 + $0x1b0] sm:$0xff] %v1760
          %1869 = vst [vmem:[%s305 + $0x1b8] sm:$0xff] %v1761
          %1870 = vst [vmem:[%s305 + $0x1c0] sm:$0xff] %v1762
          %1871 = vst [vmem:[%s305 + $0x1c8] sm:$0xff] %v1763
          %1872 = vst [vmem:[%s305 + $0x1d0] sm:$0xff] %v1764
          %1873 = vst [vmem:[%s305 + $0x1d8] sm:$0xff] %v1765
          %1874 = vst [vmem:[%s305 + $0x1e0] sm:$0xff] %v1766
          %1875 = vst [vmem:[%s305 + $0x1e8] sm:$0xff] %v1767
          %1876 = vst [vmem:[%s305 + $0x1f0] sm:$0xff] %v1768
          %1877 = vst [vmem:[%s305 + $0x1f8] sm:$0xff] %v1769
          %1878 = vst [vmem:[%s305 + $0x200] sm:$0xff] %v1770
          %1879 = vst [vmem:[%s305 + $0x208] sm:$0xff] %v1771
          %1880 = vst [vmem:[%s305 + $0x210] sm:$0xff] %v1772
          %1881 = vst [vmem:[%s305 + $0x218] sm:$0xff] %v1773
          %1882 = vst [vmem:[%s305 + $0x220] sm:$0xff] %v1774
          %1883 = vst [vmem:[%s305 + $0x228] sm:$0xff] %v1775
          %1884 = vst [vmem:[%s305 + $0x230] sm:$0xff] %v1776
          %1885 = vst [vmem:[%s305 + $0x238] sm:$0xff] %v1777
          %1886 = vst [vmem:[%s305 + $0x240] sm:$0xff] %v1778
          %1887 = vst [vmem:[%s305 + $0x248] sm:$0xff] %v1779
          %1888 = vst [vmem:[%s305 + $0x250] sm:$0xff] %v1780
          %1889 = vst [vmem:[%s305 + $0x258] sm:$0xff] %v1781
          %1890 = vst [vmem:[%s305 + $0x260] sm:$0xff] %v1782
          %1891 = vst [vmem:[%s305 + $0x268] sm:$0xff] %v1783
          %1892 = vst [vmem:[%s305 + $0x270] sm:$0xff] %v1784
          %1893 = vst [vmem:[%s305 + $0x278] sm:$0xff] %v1785
          %1894 = vst [vmem:[%s305 + $0x280] sm:$0xff] %v1786
          %1895 = vst [vmem:[%s305 + $0x288] sm:$0xff] %v1787
          %1896 = vst [vmem:[%s305 + $0x290] sm:$0xff] %v1788
          %1897 = vst [vmem:[%s305 + $0x298] sm:$0xff] %v1789
          %1898 = vst [vmem:[%s305 + $0x2a0] sm:$0xff] %v1790
          %1899 = vst [vmem:[%s305 + $0x2a8] sm:$0xff] %v1791
          %1900 = vst [vmem:[%s305 + $0x2b0] sm:$0xff] %v1792
          %1901 = vst [vmem:[%s305 + $0x2b8] sm:$0xff] %v1793
          %1902 = vst [vmem:[%s305 + $0x2c0] sm:$0xff] %v1794
          %1903 = vst [vmem:[%s305 + $0x2c8] sm:$0xff] %v1795
          %1904 = vst [vmem:[%s305 + $0x2d0] sm:$0xff] %v1796
          %1905 = vst [vmem:[%s305 + $0x2d8] sm:$0xff] %v1797
          %1906 = vst [vmem:[%s305 + $0x2e0] sm:$0xff] %v1798
          %1907 = vst [vmem:[%s305 + $0x2e8] sm:$0xff] %v1799
          %1908 = vst [vmem:[%s305 + $0x2f0] sm:$0xff] %v1800
          %1909 = vst [vmem:[%s305 + $0x2f8] sm:$0xff] %v1801
          %1910 = vst [vmem:[%s305 + $0x300] sm:$0xff] %v1802
          %1911 = vst [vmem:[%s305 + $0x308] sm:$0xff] %v1803
          %1912 = vst [vmem:[%s305 + $0x310] sm:$0xff] %v1804
          %1913 = vst [vmem:[%s305 + $0x318] sm:$0xff] %v1805
          %1914 = vst [vmem:[%s305 + $0x320] sm:$0xff] %v1806
          %1915 = vst [vmem:[%s305 + $0x328] sm:$0xff] %v1807
          %1916 = vst [vmem:[%s305 + $0x330] sm:$0xff] %v1808
          %1917 = vst [vmem:[%s305 + $0x338] sm:$0xff] %v1809
          %1918 = vst [vmem:[%s305 + $0x340] sm:$0xff] %v1810
          %1919 = vst [vmem:[%s305 + $0x348] sm:$0xff] %v1811
          %1920 = vst [vmem:[%s305 + $0x350] sm:$0xff] %v1812
          %1921 = vst [vmem:[%s305 + $0x358] sm:$0xff] %v1813
        $region56: #{tpu_custom_call.1} parent=35 // pred_fallthru
          _
        %s1922 = sand.u32 %s148, 1
        %s1923 = scalar_lea.sflag [#allocation5], %s1922
        %s1924 = sand.u32 %s148, 1
        %s1925 = smul.addr %s1924, 864
        %s1926 = scalar_lea.vmem [#allocation9], %s1925
        // Predicated region
        $region57: #{tpu_custom_call.1} parent=35 // pred_check
          %p1927 = pneg %p158
        $region58: #{tpu_custom_call.1} parent=35 // pred_check_branch
          %1929 = sbr.rel (%p1927) target = $region60
        $region59: #{tpu_custom_call.1} parent=35 // pred_region
          %s1930 = smul.u32 2, %s26
          %s1932 = ssub.s32 13824, 13824
          %1933 = vsyncadd %s1923, %s1932
          %s1934 = smul.addr %s1930, 128
          %s1935 = scalar_lea.hbm %s4, %s1934
          %s1936 = sshll.u32 %s1926, 4
          %s1937 = int_to_ptr.vmem [resolvable:$true] %s1936
          %1942 = dma.vmem_to_hbm [thread:$0]  %s1937, 13824, %s1935, %s1923, 256, 512, 16
        $region60: #{tpu_custom_call.1} parent=35 // pred_fallthru
          _
      $region36: #{tpu_custom_call.1} parent=5 // pred_fallthru
        _
      %p1943 = scmp.le.s32.totalorder 2, %s17
      // Predicated region
      $region61: #{tpu_custom_call.1} parent=5 // pred_check
        %p1944 = pneg %p1943
      $region62: #{tpu_custom_call.1} parent=5 // pred_check_branch
        %1946 = sbr.rel (%p1944) target = $region64
      $region63: #{tpu_custom_call.1} parent=5 // pred_region
        %s1947 = ssub.s32 %s17, 2
        // Predicated region
        $region65: #{tpu_custom_call.1} parent=63 // pred_check
          %p1948 = pneg %p164
        $region66: #{tpu_custom_call.1} parent=63 // pred_check_branch
          %1950 = sbr.rel (%p1948) target = $region68
        $region67: #{tpu_custom_call.1} parent=63 // pred_region
          %s1951 = sand.u32 %s149, 1
          %s1952 = scalar_lea.sflag [#allocation5], %s1951
          %s1953 = sand.u32 %s149, 1
          %s1954 = smul.addr %s1953, 864
          %s1955 = scalar_lea.vmem [#allocation9], %s1954
          %1956 = dma.done %s1952, 13824
        $region68: #{tpu_custom_call.1} parent=63 // pred_fallthru
          _
      $region64: #{tpu_custom_call.1} parent=5 // pred_fallthru
        _
    $region6: #{tpu_custom_call.1} parent=1 // loop_footer
      %s21 = sadd.s32 1, %s17
    $region7: #{tpu_custom_call.1} parent=1 // loop_footer_branch
      %16 = sbr.rel target = $region3
    $region8: #{tpu_custom_call.1} parent=1 // loop_exit
      _
    %1957 = vsyncpa [#allocation4], 1
    %s1958 = scalar_lea.sflag [#allocation4], 1
    %1959 = vsyncpa %s1958, 1
    %1960 = vsyncpa [#allocation7], 1
    %s1961 = scalar_lea.sflag [#allocation7], 1
    %1962 = vsyncpa %s1961, 1
    %1963 = vsyncpa [#allocation5], 1
    %s1964 = scalar_lea.sflag [#allocation5], 1
    %1965 = vsyncpa %s1964, 1

</llo_original>
